<compile_context>
chip_gen: v7x
topology: tpu7x:2x2x1
jax: 0.10.0
libtpu: 0.0.40
codegen_flags: <defaults>
</compile_context>

<pallas_src>
import functools

import jax
import jax.numpy as jnp
from jax.experimental import pallas as pl
from jax.experimental.pallas import tpu as pltpu

LAYER_DIMS = [784, 512, 256, 128, 64, 10]
K_PAD = 896      # 784 padded up to a multiple of 128 (zero columns / zero W1 rows)
OUT_PAD = 128    # 10 padded up to a full lane width for unmasked stores


def mlp_kernel(x_ref,
               w1_ref, b1_ref,
               w2_ref, b2_ref,
               w3_ref, b3_ref,
               w4_ref, b4_ref,
               w5_ref, b5_ref,
               o_ref):
    """Whole forward pass for one batch tile; all matmuls on the MXU (bf16 in, f32 acc)."""
    h = x_ref[...]  # bf16 (tm, 896)
    for w_ref, b_ref in ((w1_ref, b1_ref), (w2_ref, b2_ref),
                         (w3_ref, b3_ref), (w4_ref, b4_ref)):
        acc = jnp.dot(h, w_ref[...], preferred_element_type=jnp.float32) + b_ref[...]
        h = jnp.maximum(acc, 0.0).astype(jnp.bfloat16)  # ReLU, back to bf16 for next MXU op
    # Final layer: raw logits (no activation), f32 output, lane-padded to 128.
    o_ref[...] = jnp.dot(h, w5_ref[...],
                         preferred_element_type=jnp.float32) + b5_ref[...]


def _round_up(x, m):
    return (x + m - 1) // m * m


@functools.partial(jax.jit, static_argnames=("tm",))
def classifier_net_forward(x, params, *, tm=512):
    """params: list of 5 (W, b) pairs with W:(in,out) f32, b:(1,out) f32."""
    x2 = x.reshape(-1, LAYER_DIMS[0]).astype(jnp.float32)  # == x.view(-1, 784)
    M = x2.shape[0]

    # Adaptive batch tile: multiple of 8, capped at `tm`, never bigger than needed.
    tm_eff = _round_up(min(tm, _round_up(M, 8)), 8)
    M_pad = _round_up(M, tm_eff)
    grid = (M_pad // tm_eff,)

    # Pad batch rows (zeros) to a multiple of tm and features 784 -> 896, cast to bf16.
    x_pad = jnp.zeros((M_pad, K_PAD), jnp.float32).at[:M, :LAYER_DIMS[0]].set(x2)
    x_pad = x_pad.astype(jnp.bfloat16)

    # Prepare padded bf16 weights + f32 biases (W1 rows 784->896, layer-5 cols 10->128).
    ws, bs = [], []
    n_layers = len(params)
    for li, (w, b) in enumerate(params):
        din, dout = w.shape
        if li == 0:
            w = jnp.zeros((K_PAD, dout), w.dtype).at[:din, :].set(w)
        if li == n_layers - 1:
            w = jnp.zeros((w.shape[0], OUT_PAD), w.dtype).at[:, :dout].set(w)
            b = jnp.zeros((1, OUT_PAD), b.dtype).at[:, :dout].set(b)
        ws.append(w.astype(jnp.bfloat16))
        bs.append(b.astype(jnp.float32))

    in_specs = [pl.BlockSpec((tm_eff, K_PAD), lambda i: (i, 0))]
    flat_args = [x_pad]
    for w, b in zip(ws, bs):
        # Constant index_map -> weights/biases are fetched once and stay VMEM resident.
        in_specs.append(pl.BlockSpec(w.shape, lambda i: (0, 0)))
        in_specs.append(pl.BlockSpec(b.shape, lambda i: (0, 0)))
        flat_args += [w, b]

    flops = 2 * M_pad * sum(int(w.shape[0]) * int(w.shape[1]) for w in ws)
    bytes_accessed = (x_pad.size * 2
                      + sum(w.size * 2 for w in ws)
                      + sum(b.size * 4 for b in bs)
                      + M_pad * OUT_PAD * 4)

    out = pl.pallas_call(
        mlp_kernel,
        out_shape=jax.ShapeDtypeStruct((M_pad, OUT_PAD), jnp.float32),
        grid=grid,
        in_specs=in_specs,
        out_specs=pl.BlockSpec((tm_eff, OUT_PAD), lambda i: (i, 0)),
        compiler_params=pltpu.CompilerParams(
            dimension_semantics=("parallel",),
            vmem_limit_bytes=48 * 1024 * 1024),
        cost_estimate=pl.CostEstimate(flops=flops, transcendentals=0,
                                      bytes_accessed=bytes_accessed),
    )(*flat_args)

    # Drop padded batch rows and padded output lanes.
    return out[:M, :LAYER_DIMS[-1]]


def init_params(key):
    """Deterministic init mimicking torch.nn.Linear default (U(-k, k), k=1/sqrt(fan_in))."""
    params = []
    for din, dout in zip(LAYER_DIMS[:-1], LAYER_DIMS[1:]):
        key, kw, kb = jax.random.split(key, 3)
        bound = 1.0 / jnp.sqrt(float(din))
        w = jax.random.uniform(kw, (din, dout), jnp.float32, -bound, bound)
        b = jax.random.uniform(kb, (1, dout), jnp.float32, -bound, bound)
        params.append((w, b))
    return params


def reference_forward_f32(x, params):
    h = x.reshape(-1, LAYER_DIMS[0]).astype(jnp.float32)
    for i, (w, b) in enumerate(params):
        h = h @ w + b
        if i < len(params) - 1:
            h = jnp.maximum(h, 0.0)
    return h


def reference_forward_bf16(x, params):
    """Same numerics as the kernel: bf16 inputs/weights, f32 accumulation."""
    h = x.reshape(-1, LAYER_DIMS[0]).astype(jnp.bfloat16)
    for i, (w, b) in enumerate(params):
        acc = jnp.dot(h, w.astype(jnp.bfloat16),
                      preferred_element_type=jnp.float32) + b.astype(jnp.float32)
        if i < len(params) - 1:
            h = jnp.maximum(acc, 0.0).astype(jnp.bfloat16)
        else:
            h = acc
    return h


if __name__ == "__main__":
    key = jax.random.PRNGKey(0)
    key, kx = jax.random.split(key)

    # MNIST-style input: batch=8, NCHW (8, 1, 28, 28) -> flattened to (8, 784).
    x = jax.random.normal(kx, (8, 1, 28, 28), dtype=jnp.float32)
    params = init_params(key)

    out = jax.block_until_ready(classifier_net_forward(x, params))

    ref_bf16 = reference_forward_bf16(x, params)
    ref_f32 = reference_forward_f32(x, params)

    assert out.shape == (8, 10), out.shape
    # Exact-numerics check against a bf16/f32-accumulate JAX reference.
    assert jnp.allclose(out, ref_bf16, atol=2e-2, rtol=2e-2), "mismatch vs bf16 reference"
    # Loose sanity check against the full-f32 reference (bf16 quantization error only).
    assert float(jnp.max(jnp.abs(out - ref_f32))) < 0.1, "too far from f32 reference"

    print("KERNEL_OK")
</pallas_src>

<mosaic_0001>
module attributes {stable_mosaic.version = 11 : i64} {
  func.func @mlp_kernel(%arg0: i32, %arg1: memref<8x896xbf16, #tpu.memory_space<vmem>>, %arg2: memref<896x512xbf16, #tpu.memory_space<vmem>>, %arg3: memref<1x512xf32, #tpu.memory_space<vmem>>, %arg4: memref<512x256xbf16, #tpu.memory_space<vmem>>, %arg5: memref<1x256xf32, #tpu.memory_space<vmem>>, %arg6: memref<256x128xbf16, #tpu.memory_space<vmem>>, %arg7: memref<1x128xf32, #tpu.memory_space<vmem>>, %arg8: memref<128x64xbf16, #tpu.memory_space<vmem>>, %arg9: memref<1x64xf32, #tpu.memory_space<vmem>>, %arg10: memref<64x128xbf16, #tpu.memory_space<vmem>>, %arg11: memref<1x128xf32, #tpu.memory_space<vmem>>, %arg12: memref<8x128xf32, #tpu.memory_space<vmem>>) attributes {dimension_semantics = [#tpu.dimension_semantics<parallel>], iteration_bounds = array<i64: 1>, scalar_prefetch = 0 : i64, scratch_operands = 0 : i64, tpu.core_type = #tpu.core_type<tc>, window_params = [{transform_indices = @transform_0, window_bounds = array<i64: 8, 896>}, {pipeline_mode = #tpu.pipeline_mode<synchronous>, transform_indices = @transform_1, window_bounds = array<i64: 896, 512>}, {pipeline_mode = #tpu.pipeline_mode<synchronous>, transform_indices = @transform_2, window_bounds = array<i64: 1, 512>}, {pipeline_mode = #tpu.pipeline_mode<synchronous>, transform_indices = @transform_3, window_bounds = array<i64: 512, 256>}, {pipeline_mode = #tpu.pipeline_mode<synchronous>, transform_indices = @transform_4, window_bounds = array<i64: 1, 256>}, {pipeline_mode = #tpu.pipeline_mode<synchronous>, transform_indices = @transform_5, window_bounds = array<i64: 256, 128>}, {pipeline_mode = #tpu.pipeline_mode<synchronous>, transform_indices = @transform_6, window_bounds = array<i64: 1, 128>}, {pipeline_mode = #tpu.pipeline_mode<synchronous>, transform_indices = @transform_7, window_bounds = array<i64: 128, 64>}, {pipeline_mode = #tpu.pipeline_mode<synchronous>, transform_indices = @transform_8, window_bounds = array<i64: 1, 64>}, {pipeline_mode = #tpu.pipeline_mode<synchronous>, transform_indices = @transform_9, window_bounds = array<i64: 64, 128>}, {pipeline_mode = #tpu.pipeline_mode<synchronous>, transform_indices = @transform_10, window_bounds = array<i64: 1, 128>}, {transform_indices = @transform_11, window_bounds = array<i64: 8, 128>}]} {
    %c0 = arith.constant 0 : index
    %c0_0 = arith.constant 0 : index
    %0 = vector.load %arg1[%c0, %c0_0] : memref<8x896xbf16, #tpu.memory_space<vmem>>, vector<8x896xbf16>
    %c0_1 = arith.constant 0 : index
    %c0_2 = arith.constant 0 : index
    %1 = vector.load %arg2[%c0_1, %c0_2] : memref<896x512xbf16, #tpu.memory_space<vmem>>, vector<896x512xbf16>
    %cst = arith.constant dense<0.000000e+00> : vector<8x512xf32>
    %2 = tpu.matmul %0, %1, %cst {dimension_numbers = #tpu.dot_dimension_numbers<[1], [0], [0], [1], [0, 0, 1, 1], [], []>} : vector<8x896xbf16>, vector<896x512xbf16>, vector<8x512xf32> -> vector<8x512xf32>
    %c0_3 = arith.constant 0 : index
    %c0_4 = arith.constant 0 : index
    %3 = vector.load %arg3[%c0_3, %c0_4] : memref<1x512xf32, #tpu.memory_space<vmem>>, vector<1x512xf32>
    %4 = vector.broadcast %3 : vector<1x512xf32> to vector<8x512xf32>
    %5 = arith.addf %2, %4 : vector<8x512xf32>
    %cst_5 = arith.constant 0.000000e+00 : f32
    %6 = vector.broadcast %cst_5 : f32 to vector<8x512xf32>
    %7 = arith.maximumf %5, %6 : vector<8x512xf32>
    %8 = arith.truncf %7 : vector<8x512xf32> to vector<8x512xbf16>
    %c0_6 = arith.constant 0 : index
    %c0_7 = arith.constant 0 : index
    %9 = vector.load %arg4[%c0_6, %c0_7] : memref<512x256xbf16, #tpu.memory_space<vmem>>, vector<512x256xbf16>
    %cst_8 = arith.constant dense<0.000000e+00> : vector<8x256xf32>
    %10 = tpu.matmul %8, %9, %cst_8 {dimension_numbers = #tpu.dot_dimension_numbers<[1], [0], [0], [1], [0, 0, 1, 1], [], []>} : vector<8x512xbf16>, vector<512x256xbf16>, vector<8x256xf32> -> vector<8x256xf32>
    %c0_9 = arith.constant 0 : index
    %c0_10 = arith.constant 0 : index
    %11 = vector.load %arg5[%c0_9, %c0_10] : memref<1x256xf32, #tpu.memory_space<vmem>>, vector<1x256xf32>
    %12 = vector.broadcast %11 : vector<1x256xf32> to vector<8x256xf32>
    %13 = arith.addf %10, %12 : vector<8x256xf32>
    %cst_11 = arith.constant 0.000000e+00 : f32
    %14 = vector.broadcast %cst_11 : f32 to vector<8x256xf32>
    %15 = arith.maximumf %13, %14 : vector<8x256xf32>
    %16 = arith.truncf %15 : vector<8x256xf32> to vector<8x256xbf16>
    %c0_12 = arith.constant 0 : index
    %c0_13 = arith.constant 0 : index
    %17 = vector.load %arg6[%c0_12, %c0_13] : memref<256x128xbf16, #tpu.memory_space<vmem>>, vector<256x128xbf16>
    %cst_14 = arith.constant dense<0.000000e+00> : vector<8x128xf32>
    %18 = tpu.matmul %16, %17, %cst_14 {dimension_numbers = #tpu.dot_dimension_numbers<[1], [0], [0], [1], [0, 0, 1, 1], [], []>} : vector<8x256xbf16>, vector<256x128xbf16>, vector<8x128xf32> -> vector<8x128xf32>
    %c0_15 = arith.constant 0 : index
    %c0_16 = arith.constant 0 : index
    %19 = vector.load %arg7[%c0_15, %c0_16] : memref<1x128xf32, #tpu.memory_space<vmem>>, vector<1x128xf32>
    %20 = vector.broadcast %19 : vector<1x128xf32> to vector<8x128xf32>
    %21 = arith.addf %18, %20 : vector<8x128xf32>
    %cst_17 = arith.constant 0.000000e+00 : f32
    %22 = vector.broadcast %cst_17 : f32 to vector<8x128xf32>
    %23 = arith.maximumf %21, %22 : vector<8x128xf32>
    %24 = arith.truncf %23 : vector<8x128xf32> to vector<8x128xbf16>
    %c0_18 = arith.constant 0 : index
    %c0_19 = arith.constant 0 : index
    %25 = vector.load %arg8[%c0_18, %c0_19] : memref<128x64xbf16, #tpu.memory_space<vmem>>, vector<128x64xbf16>
    %cst_20 = arith.constant dense<0.000000e+00> : vector<8x64xf32>
    %26 = tpu.matmul %24, %25, %cst_20 {dimension_numbers = #tpu.dot_dimension_numbers<[1], [0], [0], [1], [0, 0, 1, 1], [], []>} : vector<8x128xbf16>, vector<128x64xbf16>, vector<8x64xf32> -> vector<8x64xf32>
    %c0_21 = arith.constant 0 : index
    %c0_22 = arith.constant 0 : index
    %27 = vector.load %arg9[%c0_21, %c0_22] : memref<1x64xf32, #tpu.memory_space<vmem>>, vector<1x64xf32>
    %28 = vector.broadcast %27 : vector<1x64xf32> to vector<8x64xf32>
    %29 = arith.addf %26, %28 : vector<8x64xf32>
    %cst_23 = arith.constant 0.000000e+00 : f32
    %30 = vector.broadcast %cst_23 : f32 to vector<8x64xf32>
    %31 = arith.maximumf %29, %30 : vector<8x64xf32>
    %32 = arith.truncf %31 : vector<8x64xf32> to vector<8x64xbf16>
    %c0_24 = arith.constant 0 : index
    %c0_25 = arith.constant 0 : index
    %33 = vector.load %arg10[%c0_24, %c0_25] : memref<64x128xbf16, #tpu.memory_space<vmem>>, vector<64x128xbf16>
    %cst_26 = arith.constant dense<0.000000e+00> : vector<8x128xf32>
    %34 = tpu.matmul %32, %33, %cst_26 {dimension_numbers = #tpu.dot_dimension_numbers<[1], [0], [0], [1], [0, 0, 1, 1], [], []>} : vector<8x64xbf16>, vector<64x128xbf16>, vector<8x128xf32> -> vector<8x128xf32>
    %c0_27 = arith.constant 0 : index
    %c0_28 = arith.constant 0 : index
    %35 = vector.load %arg11[%c0_27, %c0_28] : memref<1x128xf32, #tpu.memory_space<vmem>>, vector<1x128xf32>
    %36 = vector.broadcast %35 : vector<1x128xf32> to vector<8x128xf32>
    %37 = arith.addf %34, %36 : vector<8x128xf32>
    %c0_29 = arith.constant 0 : index
    %c0_30 = arith.constant 0 : index
    %38 = vector.load %arg12[%c0_29, %c0_30] : memref<8x128xf32, #tpu.memory_space<vmem>>, vector<8x128xf32>
    tpu.vector_store %arg12[%c0_29, %c0_30], %37 {strides = array<i32>} : memref<8x128xf32, #tpu.memory_space<vmem>>, vector<8x128xf32>,
    return
  }
  func.func @transform_0(%arg0: i32) -> (i32, i32) {
    %c0_i32 = arith.constant 0 : i32
    %c0_i32_0 = arith.constant 0 : i32
    return %arg0, %c0_i32 : i32, i32
  }
  func.func @transform_1(%arg0: i32) -> (i32, i32) {
    %c0_i32 = arith.constant 0 : i32
    %c0_i32_0 = arith.constant 0 : i32
    %c0_i32_1 = arith.constant 0 : i32
    return %c0_i32, %c0_i32_0 : i32, i32
  }
  func.func @transform_2(%arg0: i32) -> (i32, i32) {
    %c0_i32 = arith.constant 0 : i32
    %c0_i32_0 = arith.constant 0 : i32
    %c0_i32_1 = arith.constant 0 : i32
    return %c0_i32, %c0_i32_0 : i32, i32
  }
  func.func @transform_3(%arg0: i32) -> (i32, i32) {
    %c0_i32 = arith.constant 0 : i32
    %c0_i32_0 = arith.constant 0 : i32
    %c0_i32_1 = arith.constant 0 : i32
    return %c0_i32, %c0_i32_0 : i32, i32
  }
  func.func @transform_4(%arg0: i32) -> (i32, i32) {
    %c0_i32 = arith.constant 0 : i32
    %c0_i32_0 = arith.constant 0 : i32
    %c0_i32_1 = arith.constant 0 : i32
    return %c0_i32, %c0_i32_0 : i32, i32
  }
  func.func @transform_5(%arg0: i32) -> (i32, i32) {
    %c0_i32 = arith.constant 0 : i32
    %c0_i32_0 = arith.constant 0 : i32
    %c0_i32_1 = arith.constant 0 : i32
    return %c0_i32, %c0_i32_0 : i32, i32
  }
  func.func @transform_6(%arg0: i32) -> (i32, i32) {
    %c0_i32 = arith.constant 0 : i32
    %c0_i32_0 = arith.constant 0 : i32
    %c0_i32_1 = arith.constant 0 : i32
    return %c0_i32, %c0_i32_0 : i32, i32
  }
  func.func @transform_7(%arg0: i32) -> (i32, i32) {
    %c0_i32 = arith.constant 0 : i32
    %c0_i32_0 = arith.constant 0 : i32
    %c0_i32_1 = arith.constant 0 : i32
    return %c0_i32, %c0_i32_0 : i32, i32
  }
  func.func @transform_8(%arg0: i32) -> (i32, i32) {
    %c0_i32 = arith.constant 0 : i32
    %c0_i32_0 = arith.constant 0 : i32
    %c0_i32_1 = arith.constant 0 : i32
    return %c0_i32, %c0_i32_0 : i32, i32
  }
  func.func @transform_9(%arg0: i32) -> (i32, i32) {
    %c0_i32 = arith.constant 0 : i32
    %c0_i32_0 = arith.constant 0 : i32
    %c0_i32_1 = arith.constant 0 : i32
    return %c0_i32, %c0_i32_0 : i32, i32
  }
  func.func @transform_10(%arg0: i32) -> (i32, i32) {
    %c0_i32 = arith.constant 0 : i32
    %c0_i32_0 = arith.constant 0 : i32
    %c0_i32_1 = arith.constant 0 : i32
    return %c0_i32, %c0_i32_0 : i32, i32
  }
  func.func @transform_11(%arg0: i32) -> (i32, i32) {
    %c0_i32 = arith.constant 0 : i32
    %c0_i32_0 = arith.constant 0 : i32
    return %arg0, %c0_i32 : i32, i32
  }
}

</mosaic_0001>

<llo_original>
// kernel: classifier_net_forward.1
$region0: #{classifier_net_forward.1}
  #allocation0 [shape = 'u32[]', space=smem, size = 0x4, offset = 0x4, fixed_abs, tag = 'smem constant byte address 0x4 - core index']
  #allocation1 [shape = 'u32[144,128]{1,0:T(1,128)}', space=vmem, size = 0x12000, scoped, tag = 'internal scratch']
  %s0 = inlined_call_operand.vmem [shape: bf16[8,896], index: 0, kind: input, shape index: {}]
  %s1 = inlined_call_operand.vmem [shape: bf16[896,512], index: 1, kind: input, shape index: {}]
  %s2 = inlined_call_operand.vmem [shape: f32[1,512], index: 2, kind: input, shape index: {}]
  %s3 = inlined_call_operand.vmem [shape: bf16[512,256], index: 3, kind: input, shape index: {}]
  %s4 = inlined_call_operand.vmem [shape: f32[1,256], index: 4, kind: input, shape index: {}]
  %s5 = inlined_call_operand.vmem [shape: bf16[256,128], index: 5, kind: input, shape index: {}]
  %s6 = inlined_call_operand.vmem [shape: f32[1,128], index: 6, kind: input, shape index: {}]
  %s7 = inlined_call_operand.vmem [shape: bf16[128,64], index: 7, kind: input, shape index: {}]
  %s8 = inlined_call_operand.vmem [shape: f32[1,64], index: 8, kind: input, shape index: {}]
  %s9 = inlined_call_operand.vmem [shape: bf16[64,128], index: 9, kind: input, shape index: {}]
  %s10 = inlined_call_operand.vmem [shape: f32[1,128], index: 10, kind: input, shape index: {}]
  %s11 = inlined_call_operand.hbm [shape: f32[8,128], index: 11, kind: output, shape index: {}]
  %s12 = sld [smem:[#allocation0]]
  $region54: #{classifier_net_forward.1} parent=0
    _
  %s14 = ssub.s32 1, %s12
  %s15 = scalar_select 0, %s14, %s12
  $region1: #{classifier_net_forward.1} parent=0
    #allocation2 [shape = 'u8[4096]{0}', space=vmem, size = 0x1000, scoped, tag = 'output window, operand 0, single buffered']
    #allocation3 [shape = 's32[1]{0}', space=sflag, size = 0x4, scoped, tag = 'scoped memory for classifier_net_forward.1']
    %16 = vsyncpa [#allocation3], 0
    // Predicated region
    $region2: #{classifier_net_forward.1} parent=1 // pred_check
      _
    $region3: #{classifier_net_forward.1} parent=1 // pred_check_branch
      %18 = sbr.rel (0) target = $region5
    $region4: #{classifier_net_forward.1} parent=1 // pred_region
      _
    $region5: #{classifier_net_forward.1} parent=1 // pred_fallthru
      _
    // Predicated region
    $region6: #{classifier_net_forward.1} parent=1 // pred_check
      _
    $region7: #{classifier_net_forward.1} parent=1 // pred_check_branch
      %20 = sbr.rel (0) target = $region9
    $region8: #{classifier_net_forward.1} parent=1 // pred_region
      _
    $region9: #{classifier_net_forward.1} parent=1 // pred_fallthru
      _
    // Predicated region
    $region10: #{classifier_net_forward.1} parent=1 // pred_check
      _
    $region11: #{classifier_net_forward.1} parent=1 // pred_check_branch
      %22 = sbr.rel (0) target = $region13
    $region12: #{classifier_net_forward.1} parent=1 // pred_region
      _
    $region13: #{classifier_net_forward.1} parent=1 // pred_fallthru
      _
    // Predicated region
    $region14: #{classifier_net_forward.1} parent=1 // pred_check
      _
    $region15: #{classifier_net_forward.1} parent=1 // pred_check_branch
      %24 = sbr.rel (0) target = $region17
    $region16: #{classifier_net_forward.1} parent=1 // pred_region
      _
    $region17: #{classifier_net_forward.1} parent=1 // pred_fallthru
      _
    // Predicated region
    $region18: #{classifier_net_forward.1} parent=1 // pred_check
      _
    $region19: #{classifier_net_forward.1} parent=1 // pred_check_branch
      %26 = sbr.rel (0) target = $region21
    $region20: #{classifier_net_forward.1} parent=1 // pred_region
      _
    $region21: #{classifier_net_forward.1} parent=1 // pred_fallthru
      _
    // Predicated region
    $region22: #{classifier_net_forward.1} parent=1 // pred_check
      _
    $region23: #{classifier_net_forward.1} parent=1 // pred_check_branch
      %28 = sbr.rel (0) target = $region25
    $region24: #{classifier_net_forward.1} parent=1 // pred_region
      _
    $region25: #{classifier_net_forward.1} parent=1 // pred_fallthru
      _
    // Predicated region
    $region26: #{classifier_net_forward.1} parent=1 // pred_check
      _
    $region27: #{classifier_net_forward.1} parent=1 // pred_check_branch
      %30 = sbr.rel (0) target = $region29
    $region28: #{classifier_net_forward.1} parent=1 // pred_region
      _
    $region29: #{classifier_net_forward.1} parent=1 // pred_fallthru
      _
    // Predicated region
    $region30: #{classifier_net_forward.1} parent=1 // pred_check
      _
    $region31: #{classifier_net_forward.1} parent=1 // pred_check_branch
      %32 = sbr.rel (0) target = $region33
    $region32: #{classifier_net_forward.1} parent=1 // pred_region
      _
    $region33: #{classifier_net_forward.1} parent=1 // pred_fallthru
      _
    // Predicated region
    $region34: #{classifier_net_forward.1} parent=1 // pred_check
      _
    $region35: #{classifier_net_forward.1} parent=1 // pred_check_branch
      %34 = sbr.rel (0) target = $region37
    $region36: #{classifier_net_forward.1} parent=1 // pred_region
      _
    $region37: #{classifier_net_forward.1} parent=1 // pred_fallthru
      _
    // Predicated region
    $region38: #{classifier_net_forward.1} parent=1 // pred_check
      _
    $region39: #{classifier_net_forward.1} parent=1 // pred_check_branch
      %36 = sbr.rel (0) target = $region41
    $region40: #{classifier_net_forward.1} parent=1 // pred_region
      _
    $region41: #{classifier_net_forward.1} parent=1 // pred_fallthru
      _
    // Predicated region
    $region42: #{classifier_net_forward.1} parent=1 // pred_check
      _
    $region43: #{classifier_net_forward.1} parent=1 // pred_check_branch
      %38 = sbr.rel (0) target = $region45
    $region44: #{classifier_net_forward.1} parent=1 // pred_region
      _
    $region45: #{classifier_net_forward.1} parent=1 // pred_fallthru
      _
    %v40 = vld [vmem:[%s0] sm:$0xff]
    %v41 = vld [vmem:[%s0 + $0x8] sm:$0xff]
    %v42 = vld [vmem:[%s0 + $0x10] sm:$0xff]
    %v43 = vld [vmem:[%s0 + $0x18] sm:$0xf]
    %v44 = vld [vmem:[%s1] sm:$0xff]
    %v45 = vld [vmem:[%s1 + $0x8] sm:$0xff]
    %v46 = vld [vmem:[%s1 + $0x10] sm:$0xff]
    %v47 = vld [vmem:[%s1 + $0x18] sm:$0xff]
    %v48 = vld [vmem:[%s1 + $0x20] sm:$0xff]
    %v49 = vld [vmem:[%s1 + $0x28] sm:$0xff]
    %v50 = vld [vmem:[%s1 + $0x30] sm:$0xff]
    %v51 = vld [vmem:[%s1 + $0x38] sm:$0xff]
    %v52 = vld [vmem:[%s1 + $0x40] sm:$0xff]
    %v53 = vld [vmem:[%s1 + $0x48] sm:$0xff]
    %v54 = vld [vmem:[%s1 + $0x50] sm:$0xff]
    %v55 = vld [vmem:[%s1 + $0x58] sm:$0xff]
    %v56 = vld [vmem:[%s1 + $0x60] sm:$0xff]
    %v57 = vld [vmem:[%s1 + $0x68] sm:$0xff]
    %v58 = vld [vmem:[%s1 + $0x70] sm:$0xff]
    %v59 = vld [vmem:[%s1 + $0x78] sm:$0xff]
    %v60 = vld [vmem:[%s1 + $0x80] sm:$0xff]
    %v61 = vld [vmem:[%s1 + $0x88] sm:$0xff]
    %v62 = vld [vmem:[%s1 + $0x90] sm:$0xff]
    %v63 = vld [vmem:[%s1 + $0x98] sm:$0xff]
    %v64 = vld [vmem:[%s1 + $0xa0] sm:$0xff]
    %v65 = vld [vmem:[%s1 + $0xa8] sm:$0xff]
    %v66 = vld [vmem:[%s1 + $0xb0] sm:$0xff]
    %v67 = vld [vmem:[%s1 + $0xb8] sm:$0xff]
    %v68 = vld [vmem:[%s1 + $0xc0] sm:$0xff]
    %v69 = vld [vmem:[%s1 + $0xc8] sm:$0xff]
    %v70 = vld [vmem:[%s1 + $0xd0] sm:$0xff]
    %v71 = vld [vmem:[%s1 + $0xd8] sm:$0xff]
    %v72 = vld [vmem:[%s1 + $0xe0] sm:$0xff]
    %v73 = vld [vmem:[%s1 + $0xe8] sm:$0xff]
    %v74 = vld [vmem:[%s1 + $0xf0] sm:$0xff]
    %v75 = vld [vmem:[%s1 + $0xf8] sm:$0xff]
    %v76 = vld [vmem:[%s1 + $0x100] sm:$0xff]
    %v77 = vld [vmem:[%s1 + $0x108] sm:$0xff]
    %v78 = vld [vmem:[%s1 + $0x110] sm:$0xff]
    %v79 = vld [vmem:[%s1 + $0x118] sm:$0xff]
    %v80 = vld [vmem:[%s1 + $0x120] sm:$0xff]
    %v81 = vld [vmem:[%s1 + $0x128] sm:$0xff]
    %v82 = vld [vmem:[%s1 + $0x130] sm:$0xff]
    %v83 = vld [vmem:[%s1 + $0x138] sm:$0xff]
    %v84 = vld [vmem:[%s1 + $0x140] sm:$0xff]
    %v85 = vld [vmem:[%s1 + $0x148] sm:$0xff]
    %v86 = vld [vmem:[%s1 + $0x150] sm:$0xff]
    %v87 = vld [vmem:[%s1 + $0x158] sm:$0xff]
    %v88 = vld [vmem:[%s1 + $0x160] sm:$0xff]
    %v89 = vld [vmem:[%s1 + $0x168] sm:$0xff]
    %v90 = vld [vmem:[%s1 + $0x170] sm:$0xff]
    %v91 = vld [vmem:[%s1 + $0x178] sm:$0xff]
    %v92 = vld [vmem:[%s1 + $0x180] sm:$0xff]
    %v93 = vld [vmem:[%s1 + $0x188] sm:$0xff]
    %v94 = vld [vmem:[%s1 + $0x190] sm:$0xff]
    %v95 = vld [vmem:[%s1 + $0x198] sm:$0xff]
    %v96 = vld [vmem:[%s1 + $0x1a0] sm:$0xff]
    %v97 = vld [vmem:[%s1 + $0x1a8] sm:$0xff]
    %v98 = vld [vmem:[%s1 + $0x1b0] sm:$0xff]
    %v99 = vld [vmem:[%s1 + $0x1b8] sm:$0xff]
    %v100 = vld [vmem:[%s1 + $0x1c0] sm:$0xff]
    %v101 = vld [vmem:[%s1 + $0x1c8] sm:$0xff]
    %v102 = vld [vmem:[%s1 + $0x1d0] sm:$0xff]
    %v103 = vld [vmem:[%s1 + $0x1d8] sm:$0xff]
    %v104 = vld [vmem:[%s1 + $0x1e0] sm:$0xff]
    %v105 = vld [vmem:[%s1 + $0x1e8] sm:$0xff]
    %v106 = vld [vmem:[%s1 + $0x1f0] sm:$0xff]
    %v107 = vld [vmem:[%s1 + $0x1f8] sm:$0xff]
    %v108 = vld [vmem:[%s1 + $0x200] sm:$0xff]
    %v109 = vld [vmem:[%s1 + $0x208] sm:$0xff]
    %v110 = vld [vmem:[%s1 + $0x210] sm:$0xff]
    %v111 = vld [vmem:[%s1 + $0x218] sm:$0xff]
    %v112 = vld [vmem:[%s1 + $0x220] sm:$0xff]
    %v113 = vld [vmem:[%s1 + $0x228] sm:$0xff]
    %v114 = vld [vmem:[%s1 + $0x230] sm:$0xff]
    %v115 = vld [vmem:[%s1 + $0x238] sm:$0xff]
    %v116 = vld [vmem:[%s1 + $0x240] sm:$0xff]
    %v117 = vld [vmem:[%s1 + $0x248] sm:$0xff]
    %v118 = vld [vmem:[%s1 + $0x250] sm:$0xff]
    %v119 = vld [vmem:[%s1 + $0x258] sm:$0xff]
    %v120 = vld [vmem:[%s1 + $0x260] sm:$0xff]
    %v121 = vld [vmem:[%s1 + $0x268] sm:$0xff]
    %v122 = vld [vmem:[%s1 + $0x270] sm:$0xff]
    %v123 = vld [vmem:[%s1 + $0x278] sm:$0xff]
    %v124 = vld [vmem:[%s1 + $0x280] sm:$0xff]
    %v125 = vld [vmem:[%s1 + $0x288] sm:$0xff]
    %v126 = vld [vmem:[%s1 + $0x290] sm:$0xff]
    %v127 = vld [vmem:[%s1 + $0x298] sm:$0xff]
    %v128 = vld [vmem:[%s1 + $0x2a0] sm:$0xff]
    %v129 = vld [vmem:[%s1 + $0x2a8] sm:$0xff]
    %v130 = vld [vmem:[%s1 + $0x2b0] sm:$0xff]
    %v131 = vld [vmem:[%s1 + $0x2b8] sm:$0xff]
    %v132 = vld [vmem:[%s1 + $0x2c0] sm:$0xff]
    %v133 = vld [vmem:[%s1 + $0x2c8] sm:$0xff]
    %v134 = vld [vmem:[%s1 + $0x2d0] sm:$0xff]
    %v135 = vld [vmem:[%s1 + $0x2d8] sm:$0xff]
    %v136 = vld [vmem:[%s1 + $0x2e0] sm:$0xff]
    %v137 = vld [vmem:[%s1 + $0x2e8] sm:$0xff]
    %v138 = vld [vmem:[%s1 + $0x2f0] sm:$0xff]
    %v139 = vld [vmem:[%s1 + $0x2f8] sm:$0xff]
    %v140 = vld [vmem:[%s1 + $0x300] sm:$0xff]
    %v141 = vld [vmem:[%s1 + $0x308] sm:$0xff]
    %v142 = vld [vmem:[%s1 + $0x310] sm:$0xff]
    %v143 = vld [vmem:[%s1 + $0x318] sm:$0xff]
    %v144 = vld [vmem:[%s1 + $0x320] sm:$0xff]
    %v145 = vld [vmem:[%s1 + $0x328] sm:$0xff]
    %v146 = vld [vmem:[%s1 + $0x330] sm:$0xff]
    %v147 = vld [vmem:[%s1 + $0x338] sm:$0xff]
    %v148 = vld [vmem:[%s1 + $0x340] sm:$0xff]
    %v149 = vld [vmem:[%s1 + $0x348] sm:$0xff]
    %v150 = vld [vmem:[%s1 + $0x350] sm:$0xff]
    %v151 = vld [vmem:[%s1 + $0x358] sm:$0xff]
    %v152 = vld [vmem:[%s1 + $0x360] sm:$0xff]
    %v153 = vld [vmem:[%s1 + $0x368] sm:$0xff]
    %v154 = vld [vmem:[%s1 + $0x370] sm:$0xff]
    %v155 = vld [vmem:[%s1 + $0x378] sm:$0xff]
    %v156 = vld [vmem:[%s1 + $0x380] sm:$0xff]
    %v157 = vld [vmem:[%s1 + $0x388] sm:$0xff]
    %v158 = vld [vmem:[%s1 + $0x390] sm:$0xff]
    %v159 = vld [vmem:[%s1 + $0x398] sm:$0xff]
    %v160 = vld [vmem:[%s1 + $0x3a0] sm:$0xff]
    %v161 = vld [vmem:[%s1 + $0x3a8] sm:$0xff]
    %v162 = vld [vmem:[%s1 + $0x3b0] sm:$0xff]
    %v163 = vld [vmem:[%s1 + $0x3b8] sm:$0xff]
    %v164 = vld [vmem:[%s1 + $0x3c0] sm:$0xff]
    %v165 = vld [vmem:[%s1 + $0x3c8] sm:$0xff]
    %v166 = vld [vmem:[%s1 + $0x3d0] sm:$0xff]
    %v167 = vld [vmem:[%s1 + $0x3d8] sm:$0xff]
    %v168 = vld [vmem:[%s1 + $0x3e0] sm:$0xff]
    %v169 = vld [vmem:[%s1 + $0x3e8] sm:$0xff]
    %v170 = vld [vmem:[%s1 + $0x3f0] sm:$0xff]
    %v171 = vld [vmem:[%s1 + $0x3f8] sm:$0xff]
    %v172 = vld [vmem:[%s1 + $0x400] sm:$0xff]
    %v173 = vld [vmem:[%s1 + $0x408] sm:$0xff]
    %v174 = vld [vmem:[%s1 + $0x410] sm:$0xff]
    %v175 = vld [vmem:[%s1 + $0x418] sm:$0xff]
    %v176 = vld [vmem:[%s1 + $0x420] sm:$0xff]
    %v177 = vld [vmem:[%s1 + $0x428] sm:$0xff]
    %v178 = vld [vmem:[%s1 + $0x430] sm:$0xff]
    %v179 = vld [vmem:[%s1 + $0x438] sm:$0xff]
    %v180 = vld [vmem:[%s1 + $0x440] sm:$0xff]
    %v181 = vld [vmem:[%s1 + $0x448] sm:$0xff]
    %v182 = vld [vmem:[%s1 + $0x450] sm:$0xff]
    %v183 = vld [vmem:[%s1 + $0x458] sm:$0xff]
    %v184 = vld [vmem:[%s1 + $0x460] sm:$0xff]
    %v185 = vld [vmem:[%s1 + $0x468] sm:$0xff]
    %v186 = vld [vmem:[%s1 + $0x470] sm:$0xff]
    %v187 = vld [vmem:[%s1 + $0x478] sm:$0xff]
    %v188 = vld [vmem:[%s1 + $0x480] sm:$0xff]
    %v189 = vld [vmem:[%s1 + $0x488] sm:$0xff]
    %v190 = vld [vmem:[%s1 + $0x490] sm:$0xff]
    %v191 = vld [vmem:[%s1 + $0x498] sm:$0xff]
    %v192 = vld [vmem:[%s1 + $0x4a0] sm:$0xff]
    %v193 = vld [vmem:[%s1 + $0x4a8] sm:$0xff]
    %v194 = vld [vmem:[%s1 + $0x4b0] sm:$0xff]
    %v195 = vld [vmem:[%s1 + $0x4b8] sm:$0xff]
    %v196 = vld [vmem:[%s1 + $0x4c0] sm:$0xff]
    %v197 = vld [vmem:[%s1 + $0x4c8] sm:$0xff]
    %v198 = vld [vmem:[%s1 + $0x4d0] sm:$0xff]
    %v199 = vld [vmem:[%s1 + $0x4d8] sm:$0xff]
    %v200 = vld [vmem:[%s1 + $0x4e0] sm:$0xff]
    %v201 = vld [vmem:[%s1 + $0x4e8] sm:$0xff]
    %v202 = vld [vmem:[%s1 + $0x4f0] sm:$0xff]
    %v203 = vld [vmem:[%s1 + $0x4f8] sm:$0xff]
    %v204 = vld [vmem:[%s1 + $0x500] sm:$0xff]
    %v205 = vld [vmem:[%s1 + $0x508] sm:$0xff]
    %v206 = vld [vmem:[%s1 + $0x510] sm:$0xff]
    %v207 = vld [vmem:[%s1 + $0x518] sm:$0xff]
    %v208 = vld [vmem:[%s1 + $0x520] sm:$0xff]
    %v209 = vld [vmem:[%s1 + $0x528] sm:$0xff]
    %v210 = vld [vmem:[%s1 + $0x530] sm:$0xff]
    %v211 = vld [vmem:[%s1 + $0x538] sm:$0xff]
    %v212 = vld [vmem:[%s1 + $0x540] sm:$0xff]
    %v213 = vld [vmem:[%s1 + $0x548] sm:$0xff]
    %v214 = vld [vmem:[%s1 + $0x550] sm:$0xff]
    %v215 = vld [vmem:[%s1 + $0x558] sm:$0xff]
    %v216 = vld [vmem:[%s1 + $0x560] sm:$0xff]
    %v217 = vld [vmem:[%s1 + $0x568] sm:$0xff]
    %v218 = vld [vmem:[%s1 + $0x570] sm:$0xff]
    %v219 = vld [vmem:[%s1 + $0x578] sm:$0xff]
    %v220 = vld [vmem:[%s1 + $0x580] sm:$0xff]
    %v221 = vld [vmem:[%s1 + $0x588] sm:$0xff]
    %v222 = vld [vmem:[%s1 + $0x590] sm:$0xff]
    %v223 = vld [vmem:[%s1 + $0x598] sm:$0xff]
    %v224 = vld [vmem:[%s1 + $0x5a0] sm:$0xff]
    %v225 = vld [vmem:[%s1 + $0x5a8] sm:$0xff]
    %v226 = vld [vmem:[%s1 + $0x5b0] sm:$0xff]
    %v227 = vld [vmem:[%s1 + $0x5b8] sm:$0xff]
    %v228 = vld [vmem:[%s1 + $0x5c0] sm:$0xff]
    %v229 = vld [vmem:[%s1 + $0x5c8] sm:$0xff]
    %v230 = vld [vmem:[%s1 + $0x5d0] sm:$0xff]
    %v231 = vld [vmem:[%s1 + $0x5d8] sm:$0xff]
    %v232 = vld [vmem:[%s1 + $0x5e0] sm:$0xff]
    %v233 = vld [vmem:[%s1 + $0x5e8] sm:$0xff]
    %v234 = vld [vmem:[%s1 + $0x5f0] sm:$0xff]
    %v235 = vld [vmem:[%s1 + $0x5f8] sm:$0xff]
    %v236 = vld [vmem:[%s1 + $0x600] sm:$0xff]
    %v237 = vld [vmem:[%s1 + $0x608] sm:$0xff]
    %v238 = vld [vmem:[%s1 + $0x610] sm:$0xff]
    %v239 = vld [vmem:[%s1 + $0x618] sm:$0xff]
    %v240 = vld [vmem:[%s1 + $0x620] sm:$0xff]
    %v241 = vld [vmem:[%s1 + $0x628] sm:$0xff]
    %v242 = vld [vmem:[%s1 + $0x630] sm:$0xff]
    %v243 = vld [vmem:[%s1 + $0x638] sm:$0xff]
    %v244 = vld [vmem:[%s1 + $0x640] sm:$0xff]
    %v245 = vld [vmem:[%s1 + $0x648] sm:$0xff]
    %v246 = vld [vmem:[%s1 + $0x650] sm:$0xff]
    %v247 = vld [vmem:[%s1 + $0x658] sm:$0xff]
    %v248 = vld [vmem:[%s1 + $0x660] sm:$0xff]
    %v249 = vld [vmem:[%s1 + $0x668] sm:$0xff]
    %v250 = vld [vmem:[%s1 + $0x670] sm:$0xff]
    %v251 = vld [vmem:[%s1 + $0x678] sm:$0xff]
    %v252 = vld [vmem:[%s1 + $0x680] sm:$0xff]
    %v253 = vld [vmem:[%s1 + $0x688] sm:$0xff]
    %v254 = vld [vmem:[%s1 + $0x690] sm:$0xff]
    %v255 = vld [vmem:[%s1 + $0x698] sm:$0xff]
    %v256 = vld [vmem:[%s1 + $0x6a0] sm:$0xff]
    %v257 = vld [vmem:[%s1 + $0x6a8] sm:$0xff]
    %v258 = vld [vmem:[%s1 + $0x6b0] sm:$0xff]
    %v259 = vld [vmem:[%s1 + $0x6b8] sm:$0xff]
    %v260 = vld [vmem:[%s1 + $0x6c0] sm:$0xff]
    %v261 = vld [vmem:[%s1 + $0x6c8] sm:$0xff]
    %v262 = vld [vmem:[%s1 + $0x6d0] sm:$0xff]
    %v263 = vld [vmem:[%s1 + $0x6d8] sm:$0xff]
    %v264 = vld [vmem:[%s1 + $0x6e0] sm:$0xff]
    %v265 = vld [vmem:[%s1 + $0x6e8] sm:$0xff]
    %v266 = vld [vmem:[%s1 + $0x6f0] sm:$0xff]
    %v267 = vld [vmem:[%s1 + $0x6f8] sm:$0xff]
    %v268 = vld [vmem:[%s2] sm:$0xf]
    %v270 = vlaneseq
    %v271 = vshrl.u32 %v270, 7
    %v272 = vsub.s32 0, %v271
    %v273 = vrot.slane %v268, %v272
    %v274 = vlaneseq
    %v275 = vshrl.u32 %v274, 7
    %v276 = vsub.s32 1, %v275
    %v277 = vrot.slane %v268, %v276
    %v278 = vlaneseq
    %v279 = vshrl.u32 %v278, 7
    %v280 = vsub.s32 2, %v279
    %v281 = vrot.slane %v268, %v280
    %v282 = vlaneseq
    %v283 = vshrl.u32 %v282, 7
    %v284 = vsub.s32 3, %v283
    %v285 = vrot.slane %v268, %v284
    %v294 = vunpack.c.l.b16 %v40
    %v295 = vunpack.c.h.b16 %v40
    %v296 = vunpack.c.l.b16 %v41
    %v297 = vunpack.c.h.b16 %v41
    %v298 = vunpack.c.l.b16 %v42
    %v299 = vunpack.c.h.b16 %v42
    %v300 = vunpack.c.l.b16 %v43
    %v301 = vpack.c.b16 %v294, %v294
    %v302 = vpack.c.b16 %v295, %v295
    %v303 = vpack.c.b16 %v296, %v296
    %v304 = vpack.c.b16 %v297, %v297
    %v305 = vpack.c.b16 %v298, %v298
    %v306 = vpack.c.b16 %v299, %v299
    %v307 = vpack.c.b16 %v300, %v300
    %v539 = vunpack.c.l.b16 %v44
    %v540 = vunpack.c.h.b16 %v44
    %v541 = vunpack.c.l.b16 %v45
    %v542 = vunpack.c.h.b16 %v45
    %v543 = vunpack.c.l.b16 %v46
    %v544 = vunpack.c.h.b16 %v46
    %v545 = vunpack.c.l.b16 %v47
    %v546 = vunpack.c.h.b16 %v47
    %v547 = vunpack.c.l.b16 %v48
    %v548 = vunpack.c.h.b16 %v48
    %v549 = vunpack.c.l.b16 %v49
    %v550 = vunpack.c.h.b16 %v49
    %v551 = vunpack.c.l.b16 %v50
    %v552 = vunpack.c.h.b16 %v50
    %v553 = vunpack.c.l.b16 %v51
    %v554 = vunpack.c.h.b16 %v51
    %v555 = vunpack.c.l.b16 %v52
    %v556 = vunpack.c.h.b16 %v52
    %v557 = vunpack.c.l.b16 %v53
    %v558 = vunpack.c.h.b16 %v53
    %v559 = vunpack.c.l.b16 %v54
    %v560 = vunpack.c.h.b16 %v54
    %v561 = vunpack.c.l.b16 %v55
    %v562 = vunpack.c.h.b16 %v55
    %v563 = vunpack.c.l.b16 %v56
    %v564 = vunpack.c.h.b16 %v56
    %v565 = vunpack.c.l.b16 %v57
    %v566 = vunpack.c.h.b16 %v57
    %v567 = vunpack.c.l.b16 %v58
    %v568 = vunpack.c.h.b16 %v58
    %v569 = vunpack.c.l.b16 %v59
    %v570 = vunpack.c.h.b16 %v59
    %v571 = vunpack.c.l.b16 %v60
    %v572 = vunpack.c.h.b16 %v60
    %v573 = vunpack.c.l.b16 %v61
    %v574 = vunpack.c.h.b16 %v61
    %v575 = vunpack.c.l.b16 %v62
    %v576 = vunpack.c.h.b16 %v62
    %v577 = vunpack.c.l.b16 %v63
    %v578 = vunpack.c.h.b16 %v63
    %v579 = vunpack.c.l.b16 %v64
    %v580 = vunpack.c.h.b16 %v64
    %v581 = vunpack.c.l.b16 %v65
    %v582 = vunpack.c.h.b16 %v65
    %v583 = vunpack.c.l.b16 %v66
    %v584 = vunpack.c.h.b16 %v66
    %v585 = vunpack.c.l.b16 %v67
    %v586 = vunpack.c.h.b16 %v67
    %v587 = vunpack.c.l.b16 %v68
    %v588 = vunpack.c.h.b16 %v68
    %v589 = vunpack.c.l.b16 %v69
    %v590 = vunpack.c.h.b16 %v69
    %v591 = vunpack.c.l.b16 %v70
    %v592 = vunpack.c.h.b16 %v70
    %v593 = vunpack.c.l.b16 %v71
    %v594 = vunpack.c.h.b16 %v71
    %v595 = vunpack.c.l.b16 %v72
    %v596 = vunpack.c.h.b16 %v72
    %v597 = vunpack.c.l.b16 %v73
    %v598 = vunpack.c.h.b16 %v73
    %v599 = vunpack.c.l.b16 %v74
    %v600 = vunpack.c.h.b16 %v74
    %v601 = vunpack.c.l.b16 %v75
    %v602 = vunpack.c.h.b16 %v75
    %v603 = vunpack.c.l.b16 %v76
    %v604 = vunpack.c.h.b16 %v76
    %v605 = vunpack.c.l.b16 %v77
    %v606 = vunpack.c.h.b16 %v77
    %v607 = vunpack.c.l.b16 %v78
    %v608 = vunpack.c.h.b16 %v78
    %v609 = vunpack.c.l.b16 %v79
    %v610 = vunpack.c.h.b16 %v79
    %v611 = vunpack.c.l.b16 %v80
    %v612 = vunpack.c.h.b16 %v80
    %v613 = vunpack.c.l.b16 %v81
    %v614 = vunpack.c.h.b16 %v81
    %v615 = vunpack.c.l.b16 %v82
    %v616 = vunpack.c.h.b16 %v82
    %v617 = vunpack.c.l.b16 %v83
    %v618 = vunpack.c.h.b16 %v83
    %v619 = vunpack.c.l.b16 %v84
    %v620 = vunpack.c.h.b16 %v84
    %v621 = vunpack.c.l.b16 %v85
    %v622 = vunpack.c.h.b16 %v85
    %v623 = vunpack.c.l.b16 %v86
    %v624 = vunpack.c.h.b16 %v86
    %v625 = vunpack.c.l.b16 %v87
    %v626 = vunpack.c.h.b16 %v87
    %v627 = vunpack.c.l.b16 %v88
    %v628 = vunpack.c.h.b16 %v88
    %v629 = vunpack.c.l.b16 %v89
    %v630 = vunpack.c.h.b16 %v89
    %v631 = vunpack.c.l.b16 %v90
    %v632 = vunpack.c.h.b16 %v90
    %v633 = vunpack.c.l.b16 %v91
    %v634 = vunpack.c.h.b16 %v91
    %v635 = vunpack.c.l.b16 %v92
    %v636 = vunpack.c.h.b16 %v92
    %v637 = vunpack.c.l.b16 %v93
    %v638 = vunpack.c.h.b16 %v93
    %v639 = vunpack.c.l.b16 %v94
    %v640 = vunpack.c.h.b16 %v94
    %v641 = vunpack.c.l.b16 %v95
    %v642 = vunpack.c.h.b16 %v95
    %v643 = vunpack.c.l.b16 %v96
    %v644 = vunpack.c.h.b16 %v96
    %v645 = vunpack.c.l.b16 %v97
    %v646 = vunpack.c.h.b16 %v97
    %v647 = vunpack.c.l.b16 %v98
    %v648 = vunpack.c.h.b16 %v98
    %v649 = vunpack.c.l.b16 %v99
    %v650 = vunpack.c.h.b16 %v99
    %v651 = vunpack.c.l.b16 %v100
    %v652 = vunpack.c.h.b16 %v100
    %v653 = vunpack.c.l.b16 %v101
    %v654 = vunpack.c.h.b16 %v101
    %v655 = vunpack.c.l.b16 %v102
    %v656 = vunpack.c.h.b16 %v102
    %v657 = vunpack.c.l.b16 %v103
    %v658 = vunpack.c.h.b16 %v103
    %v659 = vunpack.c.l.b16 %v104
    %v660 = vunpack.c.h.b16 %v104
    %v661 = vunpack.c.l.b16 %v105
    %v662 = vunpack.c.h.b16 %v105
    %v663 = vunpack.c.l.b16 %v106
    %v664 = vunpack.c.h.b16 %v106
    %v665 = vunpack.c.l.b16 %v107
    %v666 = vunpack.c.h.b16 %v107
    %v667 = vunpack.c.l.b16 %v108
    %v668 = vunpack.c.h.b16 %v108
    %v669 = vunpack.c.l.b16 %v109
    %v670 = vunpack.c.h.b16 %v109
    %v671 = vunpack.c.l.b16 %v110
    %v672 = vunpack.c.h.b16 %v110
    %v673 = vunpack.c.l.b16 %v111
    %v674 = vunpack.c.h.b16 %v111
    %v675 = vunpack.c.l.b16 %v112
    %v676 = vunpack.c.h.b16 %v112
    %v677 = vunpack.c.l.b16 %v113
    %v678 = vunpack.c.h.b16 %v113
    %v679 = vunpack.c.l.b16 %v114
    %v680 = vunpack.c.h.b16 %v114
    %v681 = vunpack.c.l.b16 %v115
    %v682 = vunpack.c.h.b16 %v115
    %v683 = vunpack.c.l.b16 %v116
    %v684 = vunpack.c.h.b16 %v116
    %v685 = vunpack.c.l.b16 %v117
    %v686 = vunpack.c.h.b16 %v117
    %v687 = vunpack.c.l.b16 %v118
    %v688 = vunpack.c.h.b16 %v118
    %v689 = vunpack.c.l.b16 %v119
    %v690 = vunpack.c.h.b16 %v119
    %v691 = vunpack.c.l.b16 %v120
    %v692 = vunpack.c.h.b16 %v120
    %v693 = vunpack.c.l.b16 %v121
    %v694 = vunpack.c.h.b16 %v121
    %v695 = vunpack.c.l.b16 %v122
    %v696 = vunpack.c.h.b16 %v122
    %v697 = vunpack.c.l.b16 %v123
    %v698 = vunpack.c.h.b16 %v123
    %v699 = vunpack.c.l.b16 %v124
    %v700 = vunpack.c.h.b16 %v124
    %v701 = vunpack.c.l.b16 %v125
    %v702 = vunpack.c.h.b16 %v125
    %v703 = vunpack.c.l.b16 %v126
    %v704 = vunpack.c.h.b16 %v126
    %v705 = vunpack.c.l.b16 %v127
    %v706 = vunpack.c.h.b16 %v127
    %v707 = vunpack.c.l.b16 %v128
    %v708 = vunpack.c.h.b16 %v128
    %v709 = vunpack.c.l.b16 %v129
    %v710 = vunpack.c.h.b16 %v129
    %v711 = vunpack.c.l.b16 %v130
    %v712 = vunpack.c.h.b16 %v130
    %v713 = vunpack.c.l.b16 %v131
    %v714 = vunpack.c.h.b16 %v131
    %v715 = vunpack.c.l.b16 %v132
    %v716 = vunpack.c.h.b16 %v132
    %v717 = vunpack.c.l.b16 %v133
    %v718 = vunpack.c.h.b16 %v133
    %v719 = vunpack.c.l.b16 %v134
    %v720 = vunpack.c.h.b16 %v134
    %v721 = vunpack.c.l.b16 %v135
    %v722 = vunpack.c.h.b16 %v135
    %v723 = vunpack.c.l.b16 %v136
    %v724 = vunpack.c.h.b16 %v136
    %v725 = vunpack.c.l.b16 %v137
    %v726 = vunpack.c.h.b16 %v137
    %v727 = vunpack.c.l.b16 %v138
    %v728 = vunpack.c.h.b16 %v138
    %v729 = vunpack.c.l.b16 %v139
    %v730 = vunpack.c.h.b16 %v139
    %v731 = vunpack.c.l.b16 %v140
    %v732 = vunpack.c.h.b16 %v140
    %v733 = vunpack.c.l.b16 %v141
    %v734 = vunpack.c.h.b16 %v141
    %v735 = vunpack.c.l.b16 %v142
    %v736 = vunpack.c.h.b16 %v142
    %v737 = vunpack.c.l.b16 %v143
    %v738 = vunpack.c.h.b16 %v143
    %v739 = vunpack.c.l.b16 %v144
    %v740 = vunpack.c.h.b16 %v144
    %v741 = vunpack.c.l.b16 %v145
    %v742 = vunpack.c.h.b16 %v145
    %v743 = vunpack.c.l.b16 %v146
    %v744 = vunpack.c.h.b16 %v146
    %v745 = vunpack.c.l.b16 %v147
    %v746 = vunpack.c.h.b16 %v147
    %v747 = vunpack.c.l.b16 %v148
    %v748 = vunpack.c.h.b16 %v148
    %v749 = vunpack.c.l.b16 %v149
    %v750 = vunpack.c.h.b16 %v149
    %v751 = vunpack.c.l.b16 %v150
    %v752 = vunpack.c.h.b16 %v150
    %v753 = vunpack.c.l.b16 %v151
    %v754 = vunpack.c.h.b16 %v151
    %v755 = vunpack.c.l.b16 %v152
    %v756 = vunpack.c.h.b16 %v152
    %v757 = vunpack.c.l.b16 %v153
    %v758 = vunpack.c.h.b16 %v153
    %v759 = vunpack.c.l.b16 %v154
    %v760 = vunpack.c.h.b16 %v154
    %v761 = vunpack.c.l.b16 %v155
    %v762 = vunpack.c.h.b16 %v155
    %v763 = vunpack.c.l.b16 %v156
    %v764 = vunpack.c.h.b16 %v156
    %v765 = vunpack.c.l.b16 %v157
    %v766 = vunpack.c.h.b16 %v157
    %v767 = vunpack.c.l.b16 %v158
    %v768 = vunpack.c.h.b16 %v158
    %v769 = vunpack.c.l.b16 %v159
    %v770 = vunpack.c.h.b16 %v159
    %v771 = vunpack.c.l.b16 %v160
    %v772 = vunpack.c.h.b16 %v160
    %v773 = vunpack.c.l.b16 %v161
    %v774 = vunpack.c.h.b16 %v161
    %v775 = vunpack.c.l.b16 %v162
    %v776 = vunpack.c.h.b16 %v162
    %v777 = vunpack.c.l.b16 %v163
    %v778 = vunpack.c.h.b16 %v163
    %v779 = vunpack.c.l.b16 %v164
    %v780 = vunpack.c.h.b16 %v164
    %v781 = vunpack.c.l.b16 %v165
    %v782 = vunpack.c.h.b16 %v165
    %v783 = vunpack.c.l.b16 %v166
    %v784 = vunpack.c.h.b16 %v166
    %v785 = vunpack.c.l.b16 %v167
    %v786 = vunpack.c.h.b16 %v167
    %v787 = vunpack.c.l.b16 %v168
    %v788 = vunpack.c.h.b16 %v168
    %v789 = vunpack.c.l.b16 %v169
    %v790 = vunpack.c.h.b16 %v169
    %v791 = vunpack.c.l.b16 %v170
    %v792 = vunpack.c.h.b16 %v170
    %v793 = vunpack.c.l.b16 %v171
    %v794 = vunpack.c.h.b16 %v171
    %v795 = vunpack.c.l.b16 %v172
    %v796 = vunpack.c.h.b16 %v172
    %v797 = vunpack.c.l.b16 %v173
    %v798 = vunpack.c.h.b16 %v173
    %v799 = vunpack.c.l.b16 %v174
    %v800 = vunpack.c.h.b16 %v174
    %v801 = vunpack.c.l.b16 %v175
    %v802 = vunpack.c.h.b16 %v175
    %v803 = vunpack.c.l.b16 %v176
    %v804 = vunpack.c.h.b16 %v176
    %v805 = vunpack.c.l.b16 %v177
    %v806 = vunpack.c.h.b16 %v177
    %v807 = vunpack.c.l.b16 %v178
    %v808 = vunpack.c.h.b16 %v178
    %v809 = vunpack.c.l.b16 %v179
    %v810 = vunpack.c.h.b16 %v179
    %v811 = vunpack.c.l.b16 %v180
    %v812 = vunpack.c.h.b16 %v180
    %v813 = vunpack.c.l.b16 %v181
    %v814 = vunpack.c.h.b16 %v181
    %v815 = vunpack.c.l.b16 %v182
    %v816 = vunpack.c.h.b16 %v182
    %v817 = vunpack.c.l.b16 %v183
    %v818 = vunpack.c.h.b16 %v183
    %v819 = vunpack.c.l.b16 %v184
    %v820 = vunpack.c.h.b16 %v184
    %v821 = vunpack.c.l.b16 %v185
    %v822 = vunpack.c.h.b16 %v185
    %v823 = vunpack.c.l.b16 %v186
    %v824 = vunpack.c.h.b16 %v186
    %v825 = vunpack.c.l.b16 %v187
    %v826 = vunpack.c.h.b16 %v187
    %v827 = vunpack.c.l.b16 %v188
    %v828 = vunpack.c.h.b16 %v188
    %v829 = vunpack.c.l.b16 %v189
    %v830 = vunpack.c.h.b16 %v189
    %v831 = vunpack.c.l.b16 %v190
    %v832 = vunpack.c.h.b16 %v190
    %v833 = vunpack.c.l.b16 %v191
    %v834 = vunpack.c.h.b16 %v191
    %v835 = vunpack.c.l.b16 %v192
    %v836 = vunpack.c.h.b16 %v192
    %v837 = vunpack.c.l.b16 %v193
    %v838 = vunpack.c.h.b16 %v193
    %v839 = vunpack.c.l.b16 %v194
    %v840 = vunpack.c.h.b16 %v194
    %v841 = vunpack.c.l.b16 %v195
    %v842 = vunpack.c.h.b16 %v195
    %v843 = vunpack.c.l.b16 %v196
    %v844 = vunpack.c.h.b16 %v196
    %v845 = vunpack.c.l.b16 %v197
    %v846 = vunpack.c.h.b16 %v197
    %v847 = vunpack.c.l.b16 %v198
    %v848 = vunpack.c.h.b16 %v198
    %v849 = vunpack.c.l.b16 %v199
    %v850 = vunpack.c.h.b16 %v199
    %v851 = vunpack.c.l.b16 %v200
    %v852 = vunpack.c.h.b16 %v200
    %v853 = vunpack.c.l.b16 %v201
    %v854 = vunpack.c.h.b16 %v201
    %v855 = vunpack.c.l.b16 %v202
    %v856 = vunpack.c.h.b16 %v202
    %v857 = vunpack.c.l.b16 %v203
    %v858 = vunpack.c.h.b16 %v203
    %v859 = vunpack.c.l.b16 %v204
    %v860 = vunpack.c.h.b16 %v204
    %v861 = vunpack.c.l.b16 %v205
    %v862 = vunpack.c.h.b16 %v205
    %v863 = vunpack.c.l.b16 %v206
    %v864 = vunpack.c.h.b16 %v206
    %v865 = vunpack.c.l.b16 %v207
    %v866 = vunpack.c.h.b16 %v207
    %v867 = vunpack.c.l.b16 %v208
    %v868 = vunpack.c.h.b16 %v208
    %v869 = vunpack.c.l.b16 %v209
    %v870 = vunpack.c.h.b16 %v209
    %v871 = vunpack.c.l.b16 %v210
    %v872 = vunpack.c.h.b16 %v210
    %v873 = vunpack.c.l.b16 %v211
    %v874 = vunpack.c.h.b16 %v211
    %v875 = vunpack.c.l.b16 %v212
    %v876 = vunpack.c.h.b16 %v212
    %v877 = vunpack.c.l.b16 %v213
    %v878 = vunpack.c.h.b16 %v213
    %v879 = vunpack.c.l.b16 %v214
    %v880 = vunpack.c.h.b16 %v214
    %v881 = vunpack.c.l.b16 %v215
    %v882 = vunpack.c.h.b16 %v215
    %v883 = vunpack.c.l.b16 %v216
    %v884 = vunpack.c.h.b16 %v216
    %v885 = vunpack.c.l.b16 %v217
    %v886 = vunpack.c.h.b16 %v217
    %v887 = vunpack.c.l.b16 %v218
    %v888 = vunpack.c.h.b16 %v218
    %v889 = vunpack.c.l.b16 %v219
    %v890 = vunpack.c.h.b16 %v219
    %v891 = vunpack.c.l.b16 %v220
    %v892 = vunpack.c.h.b16 %v220
    %v893 = vunpack.c.l.b16 %v221
    %v894 = vunpack.c.h.b16 %v221
    %v895 = vunpack.c.l.b16 %v222
    %v896 = vunpack.c.h.b16 %v222
    %v897 = vunpack.c.l.b16 %v223
    %v898 = vunpack.c.h.b16 %v223
    %v899 = vunpack.c.l.b16 %v224
    %v900 = vunpack.c.h.b16 %v224
    %v901 = vunpack.c.l.b16 %v225
    %v902 = vunpack.c.h.b16 %v225
    %v903 = vunpack.c.l.b16 %v226
    %v904 = vunpack.c.h.b16 %v226
    %v905 = vunpack.c.l.b16 %v227
    %v906 = vunpack.c.h.b16 %v227
    %v907 = vunpack.c.l.b16 %v228
    %v908 = vunpack.c.h.b16 %v228
    %v909 = vunpack.c.l.b16 %v229
    %v910 = vunpack.c.h.b16 %v229
    %v911 = vunpack.c.l.b16 %v230
    %v912 = vunpack.c.h.b16 %v230
    %v913 = vunpack.c.l.b16 %v231
    %v914 = vunpack.c.h.b16 %v231
    %v915 = vunpack.c.l.b16 %v232
    %v916 = vunpack.c.h.b16 %v232
    %v917 = vunpack.c.l.b16 %v233
    %v918 = vunpack.c.h.b16 %v233
    %v919 = vunpack.c.l.b16 %v234
    %v920 = vunpack.c.h.b16 %v234
    %v921 = vunpack.c.l.b16 %v235
    %v922 = vunpack.c.h.b16 %v235
    %v923 = vunpack.c.l.b16 %v236
    %v924 = vunpack.c.h.b16 %v236
    %v925 = vunpack.c.l.b16 %v237
    %v926 = vunpack.c.h.b16 %v237
    %v927 = vunpack.c.l.b16 %v238
    %v928 = vunpack.c.h.b16 %v238
    %v929 = vunpack.c.l.b16 %v239
    %v930 = vunpack.c.h.b16 %v239
    %v931 = vunpack.c.l.b16 %v240
    %v932 = vunpack.c.h.b16 %v240
    %v933 = vunpack.c.l.b16 %v241
    %v934 = vunpack.c.h.b16 %v241
    %v935 = vunpack.c.l.b16 %v242
    %v936 = vunpack.c.h.b16 %v242
    %v937 = vunpack.c.l.b16 %v243
    %v938 = vunpack.c.h.b16 %v243
    %v939 = vunpack.c.l.b16 %v244
    %v940 = vunpack.c.h.b16 %v244
    %v941 = vunpack.c.l.b16 %v245
    %v942 = vunpack.c.h.b16 %v245
    %v943 = vunpack.c.l.b16 %v246
    %v944 = vunpack.c.h.b16 %v246
    %v945 = vunpack.c.l.b16 %v247
    %v946 = vunpack.c.h.b16 %v247
    %v947 = vunpack.c.l.b16 %v248
    %v948 = vunpack.c.h.b16 %v248
    %v949 = vunpack.c.l.b16 %v249
    %v950 = vunpack.c.h.b16 %v249
    %v951 = vunpack.c.l.b16 %v250
    %v952 = vunpack.c.h.b16 %v250
    %v953 = vunpack.c.l.b16 %v251
    %v954 = vunpack.c.h.b16 %v251
    %v955 = vunpack.c.l.b16 %v252
    %v956 = vunpack.c.h.b16 %v252
    %v957 = vunpack.c.l.b16 %v253
    %v958 = vunpack.c.h.b16 %v253
    %v959 = vunpack.c.l.b16 %v254
    %v960 = vunpack.c.h.b16 %v254
    %v961 = vunpack.c.l.b16 %v255
    %v962 = vunpack.c.h.b16 %v255
    %v963 = vunpack.c.l.b16 %v256
    %v964 = vunpack.c.h.b16 %v256
    %v965 = vunpack.c.l.b16 %v257
    %v966 = vunpack.c.h.b16 %v257
    %v967 = vunpack.c.l.b16 %v258
    %v968 = vunpack.c.h.b16 %v258
    %v969 = vunpack.c.l.b16 %v259
    %v970 = vunpack.c.h.b16 %v259
    %v971 = vunpack.c.l.b16 %v260
    %v972 = vunpack.c.h.b16 %v260
    %v973 = vunpack.c.l.b16 %v261
    %v974 = vunpack.c.h.b16 %v261
    %v975 = vunpack.c.l.b16 %v262
    %v976 = vunpack.c.h.b16 %v262
    %v977 = vunpack.c.l.b16 %v263
    %v978 = vunpack.c.h.b16 %v263
    %v979 = vunpack.c.l.b16 %v264
    %v980 = vunpack.c.h.b16 %v264
    %v981 = vunpack.c.l.b16 %v265
    %v982 = vunpack.c.h.b16 %v265
    %v983 = vunpack.c.l.b16 %v266
    %v984 = vunpack.c.h.b16 %v266
    %v985 = vunpack.c.l.b16 %v267
    %v986 = vunpack.c.h.b16 %v267
    %v987 = vpack.c.b16 %v543, %v539
    %v988 = vpack.c.b16 %v544, %v540
    %v989 = vpack.c.b16 %v545, %v541
    %v990 = vpack.c.b16 %v546, %v542
    %v991 = vpack.c.b16 %v551, %v547
    %v992 = vpack.c.b16 %v552, %v548
    %v993 = vpack.c.b16 %v553, %v549
    %v994 = vpack.c.b16 %v554, %v550
    %v995 = vpack.c.b16 %v559, %v555
    %v996 = vpack.c.b16 %v560, %v556
    %v997 = vpack.c.b16 %v561, %v557
    %v998 = vpack.c.b16 %v562, %v558
    %v999 = vpack.c.b16 %v567, %v563
    %v1000 = vpack.c.b16 %v568, %v564
    %v1001 = vpack.c.b16 %v569, %v565
    %v1002 = vpack.c.b16 %v570, %v566
    %v1003 = vpack.c.b16 %v575, %v571
    %v1004 = vpack.c.b16 %v576, %v572
    %v1005 = vpack.c.b16 %v577, %v573
    %v1006 = vpack.c.b16 %v578, %v574
    %v1007 = vpack.c.b16 %v583, %v579
    %v1008 = vpack.c.b16 %v584, %v580
    %v1009 = vpack.c.b16 %v585, %v581
    %v1010 = vpack.c.b16 %v586, %v582
    %v1011 = vpack.c.b16 %v591, %v587
    %v1012 = vpack.c.b16 %v592, %v588
    %v1013 = vpack.c.b16 %v593, %v589
    %v1014 = vpack.c.b16 %v594, %v590
    %v1015 = vpack.c.b16 %v599, %v595
    %v1016 = vpack.c.b16 %v600, %v596
    %v1017 = vpack.c.b16 %v601, %v597
    %v1018 = vpack.c.b16 %v602, %v598
    %v1019 = vpack.c.b16 %v607, %v603
    %v1020 = vpack.c.b16 %v608, %v604
    %v1021 = vpack.c.b16 %v609, %v605
    %v1022 = vpack.c.b16 %v610, %v606
    %v1023 = vpack.c.b16 %v615, %v611
    %v1024 = vpack.c.b16 %v616, %v612
    %v1025 = vpack.c.b16 %v617, %v613
    %v1026 = vpack.c.b16 %v618, %v614
    %v1027 = vpack.c.b16 %v623, %v619
    %v1028 = vpack.c.b16 %v624, %v620
    %v1029 = vpack.c.b16 %v625, %v621
    %v1030 = vpack.c.b16 %v626, %v622
    %v1031 = vpack.c.b16 %v631, %v627
    %v1032 = vpack.c.b16 %v632, %v628
    %v1033 = vpack.c.b16 %v633, %v629
    %v1034 = vpack.c.b16 %v634, %v630
    %v1035 = vpack.c.b16 %v639, %v635
    %v1036 = vpack.c.b16 %v640, %v636
    %v1037 = vpack.c.b16 %v641, %v637
    %v1038 = vpack.c.b16 %v642, %v638
    %v1039 = vpack.c.b16 %v647, %v643
    %v1040 = vpack.c.b16 %v648, %v644
    %v1041 = vpack.c.b16 %v649, %v645
    %v1042 = vpack.c.b16 %v650, %v646
    %v1043 = vpack.c.b16 %v655, %v651
    %v1044 = vpack.c.b16 %v656, %v652
    %v1045 = vpack.c.b16 %v657, %v653
    %v1046 = vpack.c.b16 %v658, %v654
    %v1047 = vpack.c.b16 %v663, %v659
    %v1048 = vpack.c.b16 %v664, %v660
    %v1049 = vpack.c.b16 %v665, %v661
    %v1050 = vpack.c.b16 %v666, %v662
    %v1051 = vpack.c.b16 %v671, %v667
    %v1052 = vpack.c.b16 %v672, %v668
    %v1053 = vpack.c.b16 %v673, %v669
    %v1054 = vpack.c.b16 %v674, %v670
    %v1055 = vpack.c.b16 %v679, %v675
    %v1056 = vpack.c.b16 %v680, %v676
    %v1057 = vpack.c.b16 %v681, %v677
    %v1058 = vpack.c.b16 %v682, %v678
    %v1059 = vpack.c.b16 %v687, %v683
    %v1060 = vpack.c.b16 %v688, %v684
    %v1061 = vpack.c.b16 %v689, %v685
    %v1062 = vpack.c.b16 %v690, %v686
    %v1063 = vpack.c.b16 %v695, %v691
    %v1064 = vpack.c.b16 %v696, %v692
    %v1065 = vpack.c.b16 %v697, %v693
    %v1066 = vpack.c.b16 %v698, %v694
    %v1067 = vpack.c.b16 %v703, %v699
    %v1068 = vpack.c.b16 %v704, %v700
    %v1069 = vpack.c.b16 %v705, %v701
    %v1070 = vpack.c.b16 %v706, %v702
    %v1071 = vpack.c.b16 %v711, %v707
    %v1072 = vpack.c.b16 %v712, %v708
    %v1073 = vpack.c.b16 %v713, %v709
    %v1074 = vpack.c.b16 %v714, %v710
    %v1075 = vpack.c.b16 %v719, %v715
    %v1076 = vpack.c.b16 %v720, %v716
    %v1077 = vpack.c.b16 %v721, %v717
    %v1078 = vpack.c.b16 %v722, %v718
    %v1079 = vpack.c.b16 %v727, %v723
    %v1080 = vpack.c.b16 %v728, %v724
    %v1081 = vpack.c.b16 %v729, %v725
    %v1082 = vpack.c.b16 %v730, %v726
    %v1083 = vpack.c.b16 %v735, %v731
    %v1084 = vpack.c.b16 %v736, %v732
    %v1085 = vpack.c.b16 %v737, %v733
    %v1086 = vpack.c.b16 %v738, %v734
    %v1087 = vpack.c.b16 %v743, %v739
    %v1088 = vpack.c.b16 %v744, %v740
    %v1089 = vpack.c.b16 %v745, %v741
    %v1090 = vpack.c.b16 %v746, %v742
    %v1091 = vpack.c.b16 %v751, %v747
    %v1092 = vpack.c.b16 %v752, %v748
    %v1093 = vpack.c.b16 %v753, %v749
    %v1094 = vpack.c.b16 %v754, %v750
    %v1095 = vpack.c.b16 %v759, %v755
    %v1096 = vpack.c.b16 %v760, %v756
    %v1097 = vpack.c.b16 %v761, %v757
    %v1098 = vpack.c.b16 %v762, %v758
    %v1099 = vpack.c.b16 %v767, %v763
    %v1100 = vpack.c.b16 %v768, %v764
    %v1101 = vpack.c.b16 %v769, %v765
    %v1102 = vpack.c.b16 %v770, %v766
    %v1103 = vpack.c.b16 %v775, %v771
    %v1104 = vpack.c.b16 %v776, %v772
    %v1105 = vpack.c.b16 %v777, %v773
    %v1106 = vpack.c.b16 %v778, %v774
    %v1107 = vpack.c.b16 %v783, %v779
    %v1108 = vpack.c.b16 %v784, %v780
    %v1109 = vpack.c.b16 %v785, %v781
    %v1110 = vpack.c.b16 %v786, %v782
    %v1111 = vpack.c.b16 %v791, %v787
    %v1112 = vpack.c.b16 %v792, %v788
    %v1113 = vpack.c.b16 %v793, %v789
    %v1114 = vpack.c.b16 %v794, %v790
    %v1115 = vpack.c.b16 %v799, %v795
    %v1116 = vpack.c.b16 %v800, %v796
    %v1117 = vpack.c.b16 %v801, %v797
    %v1118 = vpack.c.b16 %v802, %v798
    %v1119 = vpack.c.b16 %v807, %v803
    %v1120 = vpack.c.b16 %v808, %v804
    %v1121 = vpack.c.b16 %v809, %v805
    %v1122 = vpack.c.b16 %v810, %v806
    %v1123 = vpack.c.b16 %v815, %v811
    %v1124 = vpack.c.b16 %v816, %v812
    %v1125 = vpack.c.b16 %v817, %v813
    %v1126 = vpack.c.b16 %v818, %v814
    %v1127 = vpack.c.b16 %v823, %v819
    %v1128 = vpack.c.b16 %v824, %v820
    %v1129 = vpack.c.b16 %v825, %v821
    %v1130 = vpack.c.b16 %v826, %v822
    %v1131 = vpack.c.b16 %v831, %v827
    %v1132 = vpack.c.b16 %v832, %v828
    %v1133 = vpack.c.b16 %v833, %v829
    %v1134 = vpack.c.b16 %v834, %v830
    %v1135 = vpack.c.b16 %v839, %v835
    %v1136 = vpack.c.b16 %v840, %v836
    %v1137 = vpack.c.b16 %v841, %v837
    %v1138 = vpack.c.b16 %v842, %v838
    %v1139 = vpack.c.b16 %v847, %v843
    %v1140 = vpack.c.b16 %v848, %v844
    %v1141 = vpack.c.b16 %v849, %v845
    %v1142 = vpack.c.b16 %v850, %v846
    %v1143 = vpack.c.b16 %v855, %v851
    %v1144 = vpack.c.b16 %v856, %v852
    %v1145 = vpack.c.b16 %v857, %v853
    %v1146 = vpack.c.b16 %v858, %v854
    %v1147 = vpack.c.b16 %v863, %v859
    %v1148 = vpack.c.b16 %v864, %v860
    %v1149 = vpack.c.b16 %v865, %v861
    %v1150 = vpack.c.b16 %v866, %v862
    %v1151 = vpack.c.b16 %v871, %v867
    %v1152 = vpack.c.b16 %v872, %v868
    %v1153 = vpack.c.b16 %v873, %v869
    %v1154 = vpack.c.b16 %v874, %v870
    %v1155 = vpack.c.b16 %v879, %v875
    %v1156 = vpack.c.b16 %v880, %v876
    %v1157 = vpack.c.b16 %v881, %v877
    %v1158 = vpack.c.b16 %v882, %v878
    %v1159 = vpack.c.b16 %v887, %v883
    %v1160 = vpack.c.b16 %v888, %v884
    %v1161 = vpack.c.b16 %v889, %v885
    %v1162 = vpack.c.b16 %v890, %v886
    %v1163 = vpack.c.b16 %v895, %v891
    %v1164 = vpack.c.b16 %v896, %v892
    %v1165 = vpack.c.b16 %v897, %v893
    %v1166 = vpack.c.b16 %v898, %v894
    %v1167 = vpack.c.b16 %v903, %v899
    %v1168 = vpack.c.b16 %v904, %v900
    %v1169 = vpack.c.b16 %v905, %v901
    %v1170 = vpack.c.b16 %v906, %v902
    %v1171 = vpack.c.b16 %v911, %v907
    %v1172 = vpack.c.b16 %v912, %v908
    %v1173 = vpack.c.b16 %v913, %v909
    %v1174 = vpack.c.b16 %v914, %v910
    %v1175 = vpack.c.b16 %v919, %v915
    %v1176 = vpack.c.b16 %v920, %v916
    %v1177 = vpack.c.b16 %v921, %v917
    %v1178 = vpack.c.b16 %v922, %v918
    %v1179 = vpack.c.b16 %v927, %v923
    %v1180 = vpack.c.b16 %v928, %v924
    %v1181 = vpack.c.b16 %v929, %v925
    %v1182 = vpack.c.b16 %v930, %v926
    %v1183 = vpack.c.b16 %v935, %v931
    %v1184 = vpack.c.b16 %v936, %v932
    %v1185 = vpack.c.b16 %v937, %v933
    %v1186 = vpack.c.b16 %v938, %v934
    %v1187 = vpack.c.b16 %v943, %v939
    %v1188 = vpack.c.b16 %v944, %v940
    %v1189 = vpack.c.b16 %v945, %v941
    %v1190 = vpack.c.b16 %v946, %v942
    %v1191 = vpack.c.b16 %v951, %v947
    %v1192 = vpack.c.b16 %v952, %v948
    %v1193 = vpack.c.b16 %v953, %v949
    %v1194 = vpack.c.b16 %v954, %v950
    %v1195 = vpack.c.b16 %v959, %v955
    %v1196 = vpack.c.b16 %v960, %v956
    %v1197 = vpack.c.b16 %v961, %v957
    %v1198 = vpack.c.b16 %v962, %v958
    %v1199 = vpack.c.b16 %v967, %v963
    %v1200 = vpack.c.b16 %v968, %v964
    %v1201 = vpack.c.b16 %v969, %v965
    %v1202 = vpack.c.b16 %v970, %v966
    %v1203 = vpack.c.b16 %v975, %v971
    %v1204 = vpack.c.b16 %v976, %v972
    %v1205 = vpack.c.b16 %v977, %v973
    %v1206 = vpack.c.b16 %v978, %v974
    %v1207 = vpack.c.b16 %v983, %v979
    %v1208 = vpack.c.b16 %v984, %v980
    %v1209 = vpack.c.b16 %v985, %v981
    %v1210 = vpack.c.b16 %v986, %v982
    %1435 = vmatprep.subr.bf16.mxu0 %v988
    %1436 = vmatpush1.bf16.msra.mxu0 %v987
    %1437 = vmatprep.subr.bf16.mxu0 %v992
    %1438 = vmatpush1.bf16.msra.mxu0 %v991
    %1439 = vmatprep.subr.bf16.mxu0 %v996
    %1440 = vmatpush1.bf16.msra.mxu0 %v995
    %1441 = vmatprep.subr.bf16.mxu0 %v1000
    %1442 = vmatpush1.bf16.msra.mxu0 %v999
    %1443 = vmatprep.subr.bf16.mxu0 %v1004
    %1444 = vmatpush1.bf16.msra.mxu0 %v1003
    %1445 = vmatprep.subr.bf16.mxu0 %v1008
    %1446 = vmatpush1.bf16.msra.mxu0 %v1007
    %1447 = vmatprep.subr.bf16.mxu0 %v1012
    %1448 = vmatpush1.bf16.msra.mxu0 %v1011
    %1449 = vmatprep.subr.bf16.mxu0 %v1016
    %1450 = vmatpush1.bf16.msra.mxu0 %v1015
    %1451 = vmatprep.subr.bf16.mxu0 %v1020
    %1452 = vmatpush1.bf16.msra.mxu0 %v1019
    %1453 = vmatprep.subr.bf16.mxu0 %v1024
    %1454 = vmatpush1.bf16.msra.mxu0 %v1023
    %1455 = vmatprep.subr.bf16.mxu0 %v1028
    %1456 = vmatpush1.bf16.msra.mxu0 %v1027
    %1457 = vmatprep.subr.bf16.mxu0 %v1032
    %1458 = vmatpush1.bf16.msra.mxu0 %v1031
    %1459 = vmatprep.subr.bf16.mxu0 %v1036
    %1460 = vmatpush1.bf16.msra.mxu0 %v1035
    %1461 = vmatprep.subr.bf16.mxu0 %v1040
    %1462 = vmatpush1.bf16.msra.mxu0 %v1039
    %1463 = vmatprep.subr.bf16.mxu0 %v1044
    %1464 = vmatpush1.bf16.msra.mxu0 %v1043
    %1465 = vmatprep.subr.bf16.mxu0 %v1048
    %1466 = vmatpush1.bf16.msra.mxu0 %v1047
    %1467 = vmatprep.mubr.bf16.mxu0 %v302
    %1468 = vmatmul.mubr.bf16.gmra.mrb[0].mxu0 %v301
    %v1469 = vpop.f32.mrb[0].mxu0
    %v1470 = vadd.f32 %v273, %v1469
    %v1471 = vpop.f32.mrb[0].mxu0
    %v1472 = vadd.f32 %v277, %v1471
    %v1473 = vpop.f32.mrb[0].mxu0
    %v1474 = vpop.f32.mrb[0].mxu0
    %1475 = vdwg.mxu0
    %1476 = vmatprep.subr.bf16.mxu0 %v1052
    %1477 = vmatpush1.bf16.msra.mxu0 %v1051
    %1478 = vmatprep.subr.bf16.mxu0 %v1056
    %1479 = vmatpush1.bf16.msra.mxu0 %v1055
    %1480 = vmatprep.subr.bf16.mxu0 %v1060
    %1481 = vmatpush1.bf16.msra.mxu0 %v1059
    %1482 = vmatprep.subr.bf16.mxu0 %v1064
    %1483 = vmatpush1.bf16.msra.mxu0 %v1063
    %1484 = vmatprep.subr.bf16.mxu0 %v1068
    %1485 = vmatpush1.bf16.msra.mxu0 %v1067
    %1486 = vmatprep.subr.bf16.mxu0 %v1072
    %1487 = vmatpush1.bf16.msra.mxu0 %v1071
    %1488 = vmatprep.subr.bf16.mxu0 %v1076
    %1489 = vmatpush1.bf16.msra.mxu0 %v1075
    %1490 = vmatprep.subr.bf16.mxu0 %v1080
    %1491 = vmatpush1.bf16.msra.mxu0 %v1079
    %1492 = vmatprep.subr.bf16.mxu0 %v1084
    %1493 = vmatpush1.bf16.msra.mxu0 %v1083
    %1494 = vmatprep.subr.bf16.mxu0 %v1088
    %1495 = vmatpush1.bf16.msra.mxu0 %v1087
    %1496 = vmatprep.subr.bf16.mxu0 %v1092
    %1497 = vmatpush1.bf16.msra.mxu0 %v1091
    %1498 = vmatprep.subr.bf16.mxu0 %v1096
    %1499 = vmatpush1.bf16.msra.mxu0 %v1095
    %1500 = vmatprep.subr.bf16.mxu0 %v1100
    %1501 = vmatpush1.bf16.msra.mxu0 %v1099
    %1502 = vmatprep.subr.bf16.mxu0 %v1104
    %1503 = vmatpush1.bf16.msra.mxu0 %v1103
    %1504 = vmatprep.subr.bf16.mxu0 %v1108
    %1505 = vmatpush1.bf16.msra.mxu0 %v1107
    %1506 = vmatprep.subr.bf16.mxu0 %v1112
    %1507 = vmatpush1.bf16.msra.mxu0 %v1111
    %1508 = vmatprep.mubr.bf16.mxu0 %v304
    %1509 = vmatmul.mubr.bf16.gmra.mrb[0].mxu0 %v303
    %v1510 = vpop.f32.mrb[0].mxu0
    %v1511 = vadd.f32 %v1470, %v1510
    %v1512 = vpop.f32.mrb[0].mxu0
    %v1513 = vadd.f32 %v1472, %v1512
    %v1514 = vpop.f32.mrb[0].mxu0
    %v1515 = vpop.f32.mrb[0].mxu0
    %1516 = vdwg.mxu0
    %1517 = vmatprep.subr.bf16.mxu0 %v1116
    %1518 = vmatpush1.bf16.msra.mxu0 %v1115
    %1519 = vmatprep.subr.bf16.mxu0 %v1120
    %1520 = vmatpush1.bf16.msra.mxu0 %v1119
    %1521 = vmatprep.subr.bf16.mxu0 %v1124
    %1522 = vmatpush1.bf16.msra.mxu0 %v1123
    %1523 = vmatprep.subr.bf16.mxu0 %v1128
    %1524 = vmatpush1.bf16.msra.mxu0 %v1127
    %1525 = vmatprep.subr.bf16.mxu0 %v1132
    %1526 = vmatpush1.bf16.msra.mxu0 %v1131
    %1527 = vmatprep.subr.bf16.mxu0 %v1136
    %1528 = vmatpush1.bf16.msra.mxu0 %v1135
    %1529 = vmatprep.subr.bf16.mxu0 %v1140
    %1530 = vmatpush1.bf16.msra.mxu0 %v1139
    %1531 = vmatprep.subr.bf16.mxu0 %v1144
    %1532 = vmatpush1.bf16.msra.mxu0 %v1143
    %1533 = vmatprep.subr.bf16.mxu0 %v1148
    %1534 = vmatpush1.bf16.msra.mxu0 %v1147
    %1535 = vmatprep.subr.bf16.mxu0 %v1152
    %1536 = vmatpush1.bf16.msra.mxu0 %v1151
    %1537 = vmatprep.subr.bf16.mxu0 %v1156
    %1538 = vmatpush1.bf16.msra.mxu0 %v1155
    %1539 = vmatprep.subr.bf16.mxu0 %v1160
    %1540 = vmatpush1.bf16.msra.mxu0 %v1159
    %1541 = vmatprep.subr.bf16.mxu0 %v1164
    %1542 = vmatpush1.bf16.msra.mxu0 %v1163
    %1543 = vmatprep.subr.bf16.mxu0 %v1168
    %1544 = vmatpush1.bf16.msra.mxu0 %v1167
    %1545 = vmatprep.subr.bf16.mxu0 %v1172
    %1546 = vmatpush1.bf16.msra.mxu0 %v1171
    %1547 = vmatprep.subr.bf16.mxu0 %v1176
    %1548 = vmatpush1.bf16.msra.mxu0 %v1175
    %1549 = vmatprep.mubr.bf16.mxu0 %v306
    %1550 = vmatmul.mubr.bf16.gmra.mrb[0].mxu0 %v305
    %v1551 = vpop.f32.mrb[0].mxu0
    %v1552 = vadd.f32 %v1511, %v1551
    %v1553 = vpop.f32.mrb[0].mxu0
    %v1554 = vadd.f32 %v1513, %v1553
    %v1555 = vpop.f32.mrb[0].mxu0
    %v1556 = vpop.f32.mrb[0].mxu0
    %1557 = vdwg.mxu0
    %1558 = vmatprep.subr.bf16.mxu0 %v1180
    %1559 = vmatpush1.bf16.msra.mxu0 %v1179
    %1560 = vmatprep.subr.bf16.mxu0 %v1184
    %1561 = vmatpush1.bf16.msra.mxu0 %v1183
    %1562 = vmatprep.subr.bf16.mxu0 %v1188
    %1563 = vmatpush1.bf16.msra.mxu0 %v1187
    %1564 = vmatprep.subr.bf16.mxu0 %v1192
    %1565 = vmatpush1.bf16.msra.mxu0 %v1191
    %1566 = vmatprep.subr.bf16.mxu0 %v1196
    %1567 = vmatpush1.bf16.msra.mxu0 %v1195
    %1568 = vmatprep.subr.bf16.mxu0 %v1200
    %1569 = vmatpush1.bf16.msra.mxu0 %v1199
    %1570 = vmatprep.subr.bf16.mxu0 %v1204
    %1571 = vmatpush1.bf16.msra.mxu0 %v1203
    %1572 = vmatprep.subr.bf16.mxu0 %v1208
    %1573 = vmatpush1.bf16.msra.mxu0 %v1207
    %1574 = vmatprep.subr.bf16.mxu0 0
    %1575 = vmatpush1.bf16.msra.mxu0 0
    %1576 = vmatprep.subr.bf16.mxu0 0
    %1577 = vmatpush1.bf16.msra.mxu0 0
    %1578 = vmatprep.subr.bf16.mxu0 0
    %1579 = vmatpush1.bf16.msra.mxu0 0
    %1580 = vmatprep.subr.bf16.mxu0 0
    %1581 = vmatpush1.bf16.msra.mxu0 0
    %1582 = vmatprep.subr.bf16.mxu0 0
    %1583 = vmatpush1.bf16.msra.mxu0 0
    %1584 = vmatprep.subr.bf16.mxu0 0
    %1585 = vmatpush1.bf16.msra.mxu0 0
    %1586 = vmatprep.subr.bf16.mxu0 0
    %1587 = vmatpush1.bf16.msra.mxu0 0
    %1588 = vmatprep.subr.bf16.mxu0 0
    %1589 = vmatpush1.bf16.msra.mxu0 0
    %1590 = vmatprep.mubr.bf16.mxu0 0
    %1591 = vmatmul.mubr.bf16.gmra.mrb[0].mxu0 %v307
    %v1592 = vpop.f32.mrb[0].mxu0
    %v1593 = vadd.f32 %v1552, %v1592
    %v1594 = vpop.f32.mrb[0].mxu0
    %v1595 = vadd.f32 %v1554, %v1594
    %v1596 = vpop.f32.mrb[0].mxu0
    %v1597 = vpop.f32.mrb[0].mxu0
    %1598 = vdwg.mxu0
    %1599 = vmatprep.subr.bf16.mxu0 %v990
    %1600 = vmatpush1.bf16.msra.mxu0 %v989
    %1601 = vmatprep.subr.bf16.mxu0 %v994
    %1602 = vmatpush1.bf16.msra.mxu0 %v993
    %1603 = vmatprep.subr.bf16.mxu0 %v998
    %1604 = vmatpush1.bf16.msra.mxu0 %v997
    %1605 = vmatprep.subr.bf16.mxu0 %v1002
    %1606 = vmatpush1.bf16.msra.mxu0 %v1001
    %1607 = vmatprep.subr.bf16.mxu0 %v1006
    %1608 = vmatpush1.bf16.msra.mxu0 %v1005
    %1609 = vmatprep.subr.bf16.mxu0 %v1010
    %1610 = vmatpush1.bf16.msra.mxu0 %v1009
    %1611 = vmatprep.subr.bf16.mxu0 %v1014
    %1612 = vmatpush1.bf16.msra.mxu0 %v1013
    %1613 = vmatprep.subr.bf16.mxu0 %v1018
    %1614 = vmatpush1.bf16.msra.mxu0 %v1017
    %1615 = vmatprep.subr.bf16.mxu0 %v1022
    %1616 = vmatpush1.bf16.msra.mxu0 %v1021
    %1617 = vmatprep.subr.bf16.mxu0 %v1026
    %1618 = vmatpush1.bf16.msra.mxu0 %v1025
    %1619 = vmatprep.subr.bf16.mxu0 %v1030
    %1620 = vmatpush1.bf16.msra.mxu0 %v1029
    %1621 = vmatprep.subr.bf16.mxu0 %v1034
    %1622 = vmatpush1.bf16.msra.mxu0 %v1033
    %1623 = vmatprep.subr.bf16.mxu0 %v1038
    %1624 = vmatpush1.bf16.msra.mxu0 %v1037
    %1625 = vmatprep.subr.bf16.mxu0 %v1042
    %1626 = vmatpush1.bf16.msra.mxu0 %v1041
    %1627 = vmatprep.subr.bf16.mxu0 %v1046
    %1628 = vmatpush1.bf16.msra.mxu0 %v1045
    %1629 = vmatprep.subr.bf16.mxu0 %v1050
    %1630 = vmatpush1.bf16.msra.mxu0 %v1049
    %1631 = vmatprep.mubr.bf16.mxu0 %v302
    %1632 = vmatmul.mubr.bf16.gmra.mrb[0].mxu0 %v301
    %v1633 = vpop.f32.mrb[0].mxu0
    %v1634 = vadd.f32 %v281, %v1633
    %v1635 = vpop.f32.mrb[0].mxu0
    %v1636 = vadd.f32 %v285, %v1635
    %v1637 = vpop.f32.mrb[0].mxu0
    %v1638 = vpop.f32.mrb[0].mxu0
    %1639 = vdwg.mxu0
    %1640 = vmatprep.subr.bf16.mxu0 %v1054
    %1641 = vmatpush1.bf16.msra.mxu0 %v1053
    %1642 = vmatprep.subr.bf16.mxu0 %v1058
    %1643 = vmatpush1.bf16.msra.mxu0 %v1057
    %1644 = vmatprep.subr.bf16.mxu0 %v1062
    %1645 = vmatpush1.bf16.msra.mxu0 %v1061
    %1646 = vmatprep.subr.bf16.mxu0 %v1066
    %1647 = vmatpush1.bf16.msra.mxu0 %v1065
    %1648 = vmatprep.subr.bf16.mxu0 %v1070
    %1649 = vmatpush1.bf16.msra.mxu0 %v1069
    %1650 = vmatprep.subr.bf16.mxu0 %v1074
    %1651 = vmatpush1.bf16.msra.mxu0 %v1073
    %1652 = vmatprep.subr.bf16.mxu0 %v1078
    %1653 = vmatpush1.bf16.msra.mxu0 %v1077
    %1654 = vmatprep.subr.bf16.mxu0 %v1082
    %1655 = vmatpush1.bf16.msra.mxu0 %v1081
    %1656 = vmatprep.subr.bf16.mxu0 %v1086
    %1657 = vmatpush1.bf16.msra.mxu0 %v1085
    %1658 = vmatprep.subr.bf16.mxu0 %v1090
    %1659 = vmatpush1.bf16.msra.mxu0 %v1089
    %1660 = vmatprep.subr.bf16.mxu0 %v1094
    %1661 = vmatpush1.bf16.msra.mxu0 %v1093
    %1662 = vmatprep.subr.bf16.mxu0 %v1098
    %1663 = vmatpush1.bf16.msra.mxu0 %v1097
    %1664 = vmatprep.subr.bf16.mxu0 %v1102
    %1665 = vmatpush1.bf16.msra.mxu0 %v1101
    %1666 = vmatprep.subr.bf16.mxu0 %v1106
    %1667 = vmatpush1.bf16.msra.mxu0 %v1105
    %1668 = vmatprep.subr.bf16.mxu0 %v1110
    %1669 = vmatpush1.bf16.msra.mxu0 %v1109
    %1670 = vmatprep.subr.bf16.mxu0 %v1114
    %1671 = vmatpush1.bf16.msra.mxu0 %v1113
    %1672 = vmatprep.mubr.bf16.mxu0 %v304
    %1673 = vmatmul.mubr.bf16.gmra.mrb[0].mxu0 %v303
    %v1674 = vpop.f32.mrb[0].mxu0
    %v1675 = vadd.f32 %v1634, %v1674
    %v1676 = vpop.f32.mrb[0].mxu0
    %v1677 = vadd.f32 %v1636, %v1676
    %v1678 = vpop.f32.mrb[0].mxu0
    %v1679 = vpop.f32.mrb[0].mxu0
    %1680 = vdwg.mxu0
    %1681 = vmatprep.subr.bf16.mxu0 %v1118
    %1682 = vmatpush1.bf16.msra.mxu0 %v1117
    %1683 = vmatprep.subr.bf16.mxu0 %v1122
    %1684 = vmatpush1.bf16.msra.mxu0 %v1121
    %1685 = vmatprep.subr.bf16.mxu0 %v1126
    %1686 = vmatpush1.bf16.msra.mxu0 %v1125
    %1687 = vmatprep.subr.bf16.mxu0 %v1130
    %1688 = vmatpush1.bf16.msra.mxu0 %v1129
    %1689 = vmatprep.subr.bf16.mxu0 %v1134
    %1690 = vmatpush1.bf16.msra.mxu0 %v1133
    %1691 = vmatprep.subr.bf16.mxu0 %v1138
    %1692 = vmatpush1.bf16.msra.mxu0 %v1137
    %1693 = vmatprep.subr.bf16.mxu0 %v1142
    %1694 = vmatpush1.bf16.msra.mxu0 %v1141
    %1695 = vmatprep.subr.bf16.mxu0 %v1146
    %1696 = vmatpush1.bf16.msra.mxu0 %v1145
    %1697 = vmatprep.subr.bf16.mxu0 %v1150
    %1698 = vmatpush1.bf16.msra.mxu0 %v1149
    %1699 = vmatprep.subr.bf16.mxu0 %v1154
    %1700 = vmatpush1.bf16.msra.mxu0 %v1153
    %1701 = vmatprep.subr.bf16.mxu0 %v1158
    %1702 = vmatpush1.bf16.msra.mxu0 %v1157
    %1703 = vmatprep.subr.bf16.mxu0 %v1162
    %1704 = vmatpush1.bf16.msra.mxu0 %v1161
    %1705 = vmatprep.subr.bf16.mxu0 %v1166
    %1706 = vmatpush1.bf16.msra.mxu0 %v1165
    %1707 = vmatprep.subr.bf16.mxu0 %v1170
    %1708 = vmatpush1.bf16.msra.mxu0 %v1169
    %1709 = vmatprep.subr.bf16.mxu0 %v1174
    %1710 = vmatpush1.bf16.msra.mxu0 %v1173
    %1711 = vmatprep.subr.bf16.mxu0 %v1178
    %1712 = vmatpush1.bf16.msra.mxu0 %v1177
    %1713 = vmatprep.mubr.bf16.mxu0 %v306
    %1714 = vmatmul.mubr.bf16.gmra.mrb[0].mxu0 %v305
    %v1715 = vpop.f32.mrb[0].mxu0
    %v1716 = vadd.f32 %v1675, %v1715
    %v1717 = vpop.f32.mrb[0].mxu0
    %v1718 = vadd.f32 %v1677, %v1717
    %v1719 = vpop.f32.mrb[0].mxu0
    %v1720 = vpop.f32.mrb[0].mxu0
    %1721 = vdwg.mxu0
    %1722 = vmatprep.subr.bf16.mxu0 %v1182
    %1723 = vmatpush1.bf16.msra.mxu0 %v1181
    %1724 = vmatprep.subr.bf16.mxu0 %v1186
    %1725 = vmatpush1.bf16.msra.mxu0 %v1185
    %1726 = vmatprep.subr.bf16.mxu0 %v1190
    %1727 = vmatpush1.bf16.msra.mxu0 %v1189
    %1728 = vmatprep.subr.bf16.mxu0 %v1194
    %1729 = vmatpush1.bf16.msra.mxu0 %v1193
    %1730 = vmatprep.subr.bf16.mxu0 %v1198
    %1731 = vmatpush1.bf16.msra.mxu0 %v1197
    %1732 = vmatprep.subr.bf16.mxu0 %v1202
    %1733 = vmatpush1.bf16.msra.mxu0 %v1201
    %1734 = vmatprep.subr.bf16.mxu0 %v1206
    %1735 = vmatpush1.bf16.msra.mxu0 %v1205
    %1736 = vmatprep.subr.bf16.mxu0 %v1210
    %1737 = vmatpush1.bf16.msra.mxu0 %v1209
    %1738 = vmatprep.subr.bf16.mxu0 0
    %1739 = vmatpush1.bf16.msra.mxu0 0
    %1740 = vmatprep.subr.bf16.mxu0 0
    %1741 = vmatpush1.bf16.msra.mxu0 0
    %1742 = vmatprep.subr.bf16.mxu0 0
    %1743 = vmatpush1.bf16.msra.mxu0 0
    %1744 = vmatprep.subr.bf16.mxu0 0
    %1745 = vmatpush1.bf16.msra.mxu0 0
    %1746 = vmatprep.subr.bf16.mxu0 0
    %1747 = vmatpush1.bf16.msra.mxu0 0
    %1748 = vmatprep.subr.bf16.mxu0 0
    %1749 = vmatpush1.bf16.msra.mxu0 0
    %1750 = vmatprep.subr.bf16.mxu0 0
    %1751 = vmatpush1.bf16.msra.mxu0 0
    %1752 = vmatprep.subr.bf16.mxu0 0
    %1753 = vmatpush1.bf16.msra.mxu0 0
    %1754 = vmatprep.mubr.bf16.mxu0 0
    %1755 = vmatmul.mubr.bf16.gmra.mrb[0].mxu0 %v307
    %v1756 = vpop.f32.mrb[0].mxu0
    %v1757 = vadd.f32 %v1716, %v1756
    %v1758 = vpop.f32.mrb[0].mxu0
    %v1759 = vadd.f32 %v1718, %v1758
    %v1760 = vpop.f32.mrb[0].mxu0
    %v1761 = vpop.f32.mrb[0].mxu0
    %1762 = vdwg.mxu0
    %v1763 = vmax.f32 %v1593, 0.0
    %v1764 = vmax.f32 %v1595, 0.0
    %v1765 = vmax.f32 %v1757, 0.0
    %v1766 = vmax.f32 %v1759, 0.0
    %v1767 = vpack.c.bf16 %v1763, %v1763
    %v1768 = vpack.c.bf16 %v1764, %v1764
    %v1769 = vpack.c.bf16 %v1765, %v1765
    %v1770 = vpack.c.bf16 %v1766, %v1766
    %v1771 = vld [vmem:[%s3] sm:$0xff]
    %v1772 = vld [vmem:[%s3 + $0x8] sm:$0xff]
    %v1773 = vld [vmem:[%s3 + $0x10] sm:$0xff]
    %v1774 = vld [vmem:[%s3 + $0x18] sm:$0xff]
    %v1775 = vld [vmem:[%s3 + $0x20] sm:$0xff]
    %v1776 = vld [vmem:[%s3 + $0x28] sm:$0xff]
    %v1777 = vld [vmem:[%s3 + $0x30] sm:$0xff]
    %v1778 = vld [vmem:[%s3 + $0x38] sm:$0xff]
    %v1779 = vld [vmem:[%s3 + $0x40] sm:$0xff]
    %v1780 = vld [vmem:[%s3 + $0x48] sm:$0xff]
    %v1781 = vld [vmem:[%s3 + $0x50] sm:$0xff]
    %v1782 = vld [vmem:[%s3 + $0x58] sm:$0xff]
    %v1783 = vld [vmem:[%s3 + $0x60] sm:$0xff]
    %v1784 = vld [vmem:[%s3 + $0x68] sm:$0xff]
    %v1785 = vld [vmem:[%s3 + $0x70] sm:$0xff]
    %v1786 = vld [vmem:[%s3 + $0x78] sm:$0xff]
    %v1787 = vld [vmem:[%s3 + $0x80] sm:$0xff]
    %v1788 = vld [vmem:[%s3 + $0x88] sm:$0xff]
    %v1789 = vld [vmem:[%s3 + $0x90] sm:$0xff]
    %v1790 = vld [vmem:[%s3 + $0x98] sm:$0xff]
    %v1791 = vld [vmem:[%s3 + $0xa0] sm:$0xff]
    %v1792 = vld [vmem:[%s3 + $0xa8] sm:$0xff]
    %v1793 = vld [vmem:[%s3 + $0xb0] sm:$0xff]
    %v1794 = vld [vmem:[%s3 + $0xb8] sm:$0xff]
    %v1795 = vld [vmem:[%s3 + $0xc0] sm:$0xff]
    %v1796 = vld [vmem:[%s3 + $0xc8] sm:$0xff]
    %v1797 = vld [vmem:[%s3 + $0xd0] sm:$0xff]
    %v1798 = vld [vmem:[%s3 + $0xd8] sm:$0xff]
    %v1799 = vld [vmem:[%s3 + $0xe0] sm:$0xff]
    %v1800 = vld [vmem:[%s3 + $0xe8] sm:$0xff]
    %v1801 = vld [vmem:[%s3 + $0xf0] sm:$0xff]
    %v1802 = vld [vmem:[%s3 + $0xf8] sm:$0xff]
    %v1803 = vld [vmem:[%s3 + $0x100] sm:$0xff]
    %v1804 = vld [vmem:[%s3 + $0x108] sm:$0xff]
    %v1805 = vld [vmem:[%s3 + $0x110] sm:$0xff]
    %v1806 = vld [vmem:[%s3 + $0x118] sm:$0xff]
    %v1807 = vld [vmem:[%s3 + $0x120] sm:$0xff]
    %v1808 = vld [vmem:[%s3 + $0x128] sm:$0xff]
    %v1809 = vld [vmem:[%s3 + $0x130] sm:$0xff]
    %v1810 = vld [vmem:[%s3 + $0x138] sm:$0xff]
    %v1811 = vld [vmem:[%s3 + $0x140] sm:$0xff]
    %v1812 = vld [vmem:[%s3 + $0x148] sm:$0xff]
    %v1813 = vld [vmem:[%s3 + $0x150] sm:$0xff]
    %v1814 = vld [vmem:[%s3 + $0x158] sm:$0xff]
    %v1815 = vld [vmem:[%s3 + $0x160] sm:$0xff]
    %v1816 = vld [vmem:[%s3 + $0x168] sm:$0xff]
    %v1817 = vld [vmem:[%s3 + $0x170] sm:$0xff]
    %v1818 = vld [vmem:[%s3 + $0x178] sm:$0xff]
    %v1819 = vld [vmem:[%s3 + $0x180] sm:$0xff]
    %v1820 = vld [vmem:[%s3 + $0x188] sm:$0xff]
    %v1821 = vld [vmem:[%s3 + $0x190] sm:$0xff]
    %v1822 = vld [vmem:[%s3 + $0x198] sm:$0xff]
    %v1823 = vld [vmem:[%s3 + $0x1a0] sm:$0xff]
    %v1824 = vld [vmem:[%s3 + $0x1a8] sm:$0xff]
    %v1825 = vld [vmem:[%s3 + $0x1b0] sm:$0xff]
    %v1826 = vld [vmem:[%s3 + $0x1b8] sm:$0xff]
    %v1827 = vld [vmem:[%s3 + $0x1c0] sm:$0xff]
    %v1828 = vld [vmem:[%s3 + $0x1c8] sm:$0xff]
    %v1829 = vld [vmem:[%s3 + $0x1d0] sm:$0xff]
    %v1830 = vld [vmem:[%s3 + $0x1d8] sm:$0xff]
    %v1831 = vld [vmem:[%s3 + $0x1e0] sm:$0xff]
    %v1832 = vld [vmem:[%s3 + $0x1e8] sm:$0xff]
    %v1833 = vld [vmem:[%s3 + $0x1f0] sm:$0xff]
    %v1834 = vld [vmem:[%s3 + $0x1f8] sm:$0xff]
    %v1835 = vld [vmem:[%s4] sm:$0x3]
    %v1837 = vlaneseq
    %v1838 = vshrl.u32 %v1837, 7
    %v1839 = vsub.s32 0, %v1838
    %v1840 = vrot.slane %v1835, %v1839
    %v1841 = vlaneseq
    %v1842 = vshrl.u32 %v1841, 7
    %v1843 = vsub.s32 1, %v1842
    %v1844 = vrot.slane %v1835, %v1843
    %v1911 = vunpack.c.l.b16 %v1771
    %v1912 = vunpack.c.h.b16 %v1771
    %v1913 = vunpack.c.l.b16 %v1772
    %v1914 = vunpack.c.h.b16 %v1772
    %v1915 = vunpack.c.l.b16 %v1773
    %v1916 = vunpack.c.h.b16 %v1773
    %v1917 = vunpack.c.l.b16 %v1774
    %v1918 = vunpack.c.h.b16 %v1774
    %v1919 = vunpack.c.l.b16 %v1775
    %v1920 = vunpack.c.h.b16 %v1775
    %v1921 = vunpack.c.l.b16 %v1776
    %v1922 = vunpack.c.h.b16 %v1776
    %v1923 = vunpack.c.l.b16 %v1777
    %v1924 = vunpack.c.h.b16 %v1777
    %v1925 = vunpack.c.l.b16 %v1778
    %v1926 = vunpack.c.h.b16 %v1778
    %v1927 = vunpack.c.l.b16 %v1779
    %v1928 = vunpack.c.h.b16 %v1779
    %v1929 = vunpack.c.l.b16 %v1780
    %v1930 = vunpack.c.h.b16 %v1780
    %v1931 = vunpack.c.l.b16 %v1781
    %v1932 = vunpack.c.h.b16 %v1781
    %v1933 = vunpack.c.l.b16 %v1782
    %v1934 = vunpack.c.h.b16 %v1782
    %v1935 = vunpack.c.l.b16 %v1783
    %v1936 = vunpack.c.h.b16 %v1783
    %v1937 = vunpack.c.l.b16 %v1784
    %v1938 = vunpack.c.h.b16 %v1784
    %v1939 = vunpack.c.l.b16 %v1785
    %v1940 = vunpack.c.h.b16 %v1785
    %v1941 = vunpack.c.l.b16 %v1786
    %v1942 = vunpack.c.h.b16 %v1786
    %v1943 = vunpack.c.l.b16 %v1787
    %v1944 = vunpack.c.h.b16 %v1787
    %v1945 = vunpack.c.l.b16 %v1788
    %v1946 = vunpack.c.h.b16 %v1788
    %v1947 = vunpack.c.l.b16 %v1789
    %v1948 = vunpack.c.h.b16 %v1789
    %v1949 = vunpack.c.l.b16 %v1790
    %v1950 = vunpack.c.h.b16 %v1790
    %v1951 = vunpack.c.l.b16 %v1791
    %v1952 = vunpack.c.h.b16 %v1791
    %v1953 = vunpack.c.l.b16 %v1792
    %v1954 = vunpack.c.h.b16 %v1792
    %v1955 = vunpack.c.l.b16 %v1793
    %v1956 = vunpack.c.h.b16 %v1793
    %v1957 = vunpack.c.l.b16 %v1794
    %v1958 = vunpack.c.h.b16 %v1794
    %v1959 = vunpack.c.l.b16 %v1795
    %v1960 = vunpack.c.h.b16 %v1795
    %v1961 = vunpack.c.l.b16 %v1796
    %v1962 = vunpack.c.h.b16 %v1796
    %v1963 = vunpack.c.l.b16 %v1797
    %v1964 = vunpack.c.h.b16 %v1797
    %v1965 = vunpack.c.l.b16 %v1798
    %v1966 = vunpack.c.h.b16 %v1798
    %v1967 = vunpack.c.l.b16 %v1799
    %v1968 = vunpack.c.h.b16 %v1799
    %v1969 = vunpack.c.l.b16 %v1800
    %v1970 = vunpack.c.h.b16 %v1800
    %v1971 = vunpack.c.l.b16 %v1801
    %v1972 = vunpack.c.h.b16 %v1801
    %v1973 = vunpack.c.l.b16 %v1802
    %v1974 = vunpack.c.h.b16 %v1802
    %v1975 = vunpack.c.l.b16 %v1803
    %v1976 = vunpack.c.h.b16 %v1803
    %v1977 = vunpack.c.l.b16 %v1804
    %v1978 = vunpack.c.h.b16 %v1804
    %v1979 = vunpack.c.l.b16 %v1805
    %v1980 = vunpack.c.h.b16 %v1805
    %v1981 = vunpack.c.l.b16 %v1806
    %v1982 = vunpack.c.h.b16 %v1806
    %v1983 = vunpack.c.l.b16 %v1807
    %v1984 = vunpack.c.h.b16 %v1807
    %v1985 = vunpack.c.l.b16 %v1808
    %v1986 = vunpack.c.h.b16 %v1808
    %v1987 = vunpack.c.l.b16 %v1809
    %v1988 = vunpack.c.h.b16 %v1809
    %v1989 = vunpack.c.l.b16 %v1810
    %v1990 = vunpack.c.h.b16 %v1810
    %v1991 = vunpack.c.l.b16 %v1811
    %v1992 = vunpack.c.h.b16 %v1811
    %v1993 = vunpack.c.l.b16 %v1812
    %v1994 = vunpack.c.h.b16 %v1812
    %v1995 = vunpack.c.l.b16 %v1813
    %v1996 = vunpack.c.h.b16 %v1813
    %v1997 = vunpack.c.l.b16 %v1814
    %v1998 = vunpack.c.h.b16 %v1814
    %v1999 = vunpack.c.l.b16 %v1815
    %v2000 = vunpack.c.h.b16 %v1815
    %v2001 = vunpack.c.l.b16 %v1816
    %v2002 = vunpack.c.h.b16 %v1816
    %v2003 = vunpack.c.l.b16 %v1817
    %v2004 = vunpack.c.h.b16 %v1817
    %v2005 = vunpack.c.l.b16 %v1818
    %v2006 = vunpack.c.h.b16 %v1818
    %v2007 = vunpack.c.l.b16 %v1819
    %v2008 = vunpack.c.h.b16 %v1819
    %v2009 = vunpack.c.l.b16 %v1820
    %v2010 = vunpack.c.h.b16 %v1820
    %v2011 = vunpack.c.l.b16 %v1821
    %v2012 = vunpack.c.h.b16 %v1821
    %v2013 = vunpack.c.l.b16 %v1822
    %v2014 = vunpack.c.h.b16 %v1822
    %v2015 = vunpack.c.l.b16 %v1823
    %v2016 = vunpack.c.h.b16 %v1823
    %v2017 = vunpack.c.l.b16 %v1824
    %v2018 = vunpack.c.h.b16 %v1824
    %v2019 = vunpack.c.l.b16 %v1825
    %v2020 = vunpack.c.h.b16 %v1825
    %v2021 = vunpack.c.l.b16 %v1826
    %v2022 = vunpack.c.h.b16 %v1826
    %v2023 = vunpack.c.l.b16 %v1827
    %v2024 = vunpack.c.h.b16 %v1827
    %v2025 = vunpack.c.l.b16 %v1828
    %v2026 = vunpack.c.h.b16 %v1828
    %v2027 = vunpack.c.l.b16 %v1829
    %v2028 = vunpack.c.h.b16 %v1829
    %v2029 = vunpack.c.l.b16 %v1830
    %v2030 = vunpack.c.h.b16 %v1830
    %v2031 = vunpack.c.l.b16 %v1831
    %v2032 = vunpack.c.h.b16 %v1831
    %v2033 = vunpack.c.l.b16 %v1832
    %v2034 = vunpack.c.h.b16 %v1832
    %v2035 = vunpack.c.l.b16 %v1833
    %v2036 = vunpack.c.h.b16 %v1833
    %v2037 = vunpack.c.l.b16 %v1834
    %v2038 = vunpack.c.h.b16 %v1834
    %v2039 = vpack.c.b16 %v1913, %v1911
    %v2040 = vpack.c.b16 %v1914, %v1912
    %v2041 = vpack.c.b16 %v1917, %v1915
    %v2042 = vpack.c.b16 %v1918, %v1916
    %v2043 = vpack.c.b16 %v1921, %v1919
    %v2044 = vpack.c.b16 %v1922, %v1920
    %v2045 = vpack.c.b16 %v1925, %v1923
    %v2046 = vpack.c.b16 %v1926, %v1924
    %v2047 = vpack.c.b16 %v1929, %v1927
    %v2048 = vpack.c.b16 %v1930, %v1928
    %v2049 = vpack.c.b16 %v1933, %v1931
    %v2050 = vpack.c.b16 %v1934, %v1932
    %v2051 = vpack.c.b16 %v1937, %v1935
    %v2052 = vpack.c.b16 %v1938, %v1936
    %v2053 = vpack.c.b16 %v1941, %v1939
    %v2054 = vpack.c.b16 %v1942, %v1940
    %v2055 = vpack.c.b16 %v1945, %v1943
    %v2056 = vpack.c.b16 %v1946, %v1944
    %v2057 = vpack.c.b16 %v1949, %v1947
    %v2058 = vpack.c.b16 %v1950, %v1948
    %v2059 = vpack.c.b16 %v1953, %v1951
    %v2060 = vpack.c.b16 %v1954, %v1952
    %v2061 = vpack.c.b16 %v1957, %v1955
    %v2062 = vpack.c.b16 %v1958, %v1956
    %v2063 = vpack.c.b16 %v1961, %v1959
    %v2064 = vpack.c.b16 %v1962, %v1960
    %v2065 = vpack.c.b16 %v1965, %v1963
    %v2066 = vpack.c.b16 %v1966, %v1964
    %v2067 = vpack.c.b16 %v1969, %v1967
    %v2068 = vpack.c.b16 %v1970, %v1968
    %v2069 = vpack.c.b16 %v1973, %v1971
    %v2070 = vpack.c.b16 %v1974, %v1972
    %v2071 = vpack.c.b16 %v1977, %v1975
    %v2072 = vpack.c.b16 %v1978, %v1976
    %v2073 = vpack.c.b16 %v1981, %v1979
    %v2074 = vpack.c.b16 %v1982, %v1980
    %v2075 = vpack.c.b16 %v1985, %v1983
    %v2076 = vpack.c.b16 %v1986, %v1984
    %v2077 = vpack.c.b16 %v1989, %v1987
    %v2078 = vpack.c.b16 %v1990, %v1988
    %v2079 = vpack.c.b16 %v1993, %v1991
    %v2080 = vpack.c.b16 %v1994, %v1992
    %v2081 = vpack.c.b16 %v1997, %v1995
    %v2082 = vpack.c.b16 %v1998, %v1996
    %v2083 = vpack.c.b16 %v2001, %v1999
    %v2084 = vpack.c.b16 %v2002, %v2000
    %v2085 = vpack.c.b16 %v2005, %v2003
    %v2086 = vpack.c.b16 %v2006, %v2004
    %v2087 = vpack.c.b16 %v2009, %v2007
    %v2088 = vpack.c.b16 %v2010, %v2008
    %v2089 = vpack.c.b16 %v2013, %v2011
    %v2090 = vpack.c.b16 %v2014, %v2012
    %v2091 = vpack.c.b16 %v2017, %v2015
    %v2092 = vpack.c.b16 %v2018, %v2016
    %v2093 = vpack.c.b16 %v2021, %v2019
    %v2094 = vpack.c.b16 %v2022, %v2020
    %v2095 = vpack.c.b16 %v2025, %v2023
    %v2096 = vpack.c.b16 %v2026, %v2024
    %v2097 = vpack.c.b16 %v2029, %v2027
    %v2098 = vpack.c.b16 %v2030, %v2028
    %v2099 = vpack.c.b16 %v2033, %v2031
    %v2100 = vpack.c.b16 %v2034, %v2032
    %v2101 = vpack.c.b16 %v2037, %v2035
    %v2102 = vpack.c.b16 %v2038, %v2036
    %2167 = vmatprep.subr.bf16.mxu0 %v2040
    %2168 = vmatpush1.bf16.msra.mxu0 %v2039
    %2169 = vmatprep.subr.bf16.mxu0 %v2042
    %2170 = vmatpush1.bf16.msra.mxu0 %v2041
    %2171 = vmatprep.subr.bf16.mxu0 %v2044
    %2172 = vmatpush1.bf16.msra.mxu0 %v2043
    %2173 = vmatprep.subr.bf16.mxu0 %v2046
    %2174 = vmatpush1.bf16.msra.mxu0 %v2045
    %2175 = vmatprep.subr.bf16.mxu0 %v2048
    %2176 = vmatpush1.bf16.msra.mxu0 %v2047
    %2177 = vmatprep.subr.bf16.mxu0 %v2050
    %2178 = vmatpush1.bf16.msra.mxu0 %v2049
    %2179 = vmatprep.subr.bf16.mxu0 %v2052
    %2180 = vmatpush1.bf16.msra.mxu0 %v2051
    %2181 = vmatprep.subr.bf16.mxu0 %v2054
    %2182 = vmatpush1.bf16.msra.mxu0 %v2053
    %2183 = vmatprep.subr.bf16.mxu0 %v2056
    %2184 = vmatpush1.bf16.msra.mxu0 %v2055
    %2185 = vmatprep.subr.bf16.mxu0 %v2058
    %2186 = vmatpush1.bf16.msra.mxu0 %v2057
    %2187 = vmatprep.subr.bf16.mxu0 %v2060
    %2188 = vmatpush1.bf16.msra.mxu0 %v2059
    %2189 = vmatprep.subr.bf16.mxu0 %v2062
    %2190 = vmatpush1.bf16.msra.mxu0 %v2061
    %2191 = vmatprep.subr.bf16.mxu0 %v2064
    %2192 = vmatpush1.bf16.msra.mxu0 %v2063
    %2193 = vmatprep.subr.bf16.mxu0 %v2066
    %2194 = vmatpush1.bf16.msra.mxu0 %v2065
    %2195 = vmatprep.subr.bf16.mxu0 %v2068
    %2196 = vmatpush1.bf16.msra.mxu0 %v2067
    %2197 = vmatprep.subr.bf16.mxu0 %v2070
    %2198 = vmatpush1.bf16.msra.mxu0 %v2069
    %2199 = vmatprep.mubr.bf16.mxu0 %v1768
    %2200 = vmatmul.mubr.bf16.gmra.mrb[0].mxu0 %v1767
    %v2201 = vpop.f32.mrb[0].mxu0
    %v2202 = vadd.f32 %v1840, %v2201
    %v2203 = vpop.f32.mrb[0].mxu0
    %v2204 = vadd.f32 %v1844, %v2203
    %v2205 = vpop.f32.mrb[0].mxu0
    %v2206 = vpop.f32.mrb[0].mxu0
    %2207 = vdwg.mxu0
    %2208 = vmatprep.subr.bf16.mxu0 %v2072
    %2209 = vmatpush1.bf16.msra.mxu0 %v2071
    %2210 = vmatprep.subr.bf16.mxu0 %v2074
    %2211 = vmatpush1.bf16.msra.mxu0 %v2073
    %2212 = vmatprep.subr.bf16.mxu0 %v2076
    %2213 = vmatpush1.bf16.msra.mxu0 %v2075
    %2214 = vmatprep.subr.bf16.mxu0 %v2078
    %2215 = vmatpush1.bf16.msra.mxu0 %v2077
    %2216 = vmatprep.subr.bf16.mxu0 %v2080
    %2217 = vmatpush1.bf16.msra.mxu0 %v2079
    %2218 = vmatprep.subr.bf16.mxu0 %v2082
    %2219 = vmatpush1.bf16.msra.mxu0 %v2081
    %2220 = vmatprep.subr.bf16.mxu0 %v2084
    %2221 = vmatpush1.bf16.msra.mxu0 %v2083
    %2222 = vmatprep.subr.bf16.mxu0 %v2086
    %2223 = vmatpush1.bf16.msra.mxu0 %v2085
    %2224 = vmatprep.subr.bf16.mxu0 %v2088
    %2225 = vmatpush1.bf16.msra.mxu0 %v2087
    %2226 = vmatprep.subr.bf16.mxu0 %v2090
    %2227 = vmatpush1.bf16.msra.mxu0 %v2089
    %2228 = vmatprep.subr.bf16.mxu0 %v2092
    %2229 = vmatpush1.bf16.msra.mxu0 %v2091
    %2230 = vmatprep.subr.bf16.mxu0 %v2094
    %2231 = vmatpush1.bf16.msra.mxu0 %v2093
    %2232 = vmatprep.subr.bf16.mxu0 %v2096
    %2233 = vmatpush1.bf16.msra.mxu0 %v2095
    %2234 = vmatprep.subr.bf16.mxu0 %v2098
    %2235 = vmatpush1.bf16.msra.mxu0 %v2097
    %2236 = vmatprep.subr.bf16.mxu0 %v2100
    %2237 = vmatpush1.bf16.msra.mxu0 %v2099
    %2238 = vmatprep.subr.bf16.mxu0 %v2102
    %2239 = vmatpush1.bf16.msra.mxu0 %v2101
    %2240 = vmatprep.mubr.bf16.mxu0 %v1770
    %2241 = vmatmul.mubr.bf16.gmra.mrb[0].mxu0 %v1769
    %v2242 = vpop.f32.mrb[0].mxu0
    %v2243 = vadd.f32 %v2202, %v2242
    %v2244 = vpop.f32.mrb[0].mxu0
    %v2245 = vadd.f32 %v2204, %v2244
    %v2246 = vpop.f32.mrb[0].mxu0
    %v2247 = vpop.f32.mrb[0].mxu0
    %2248 = vdwg.mxu0
    %v2249 = vmax.f32 %v2243, 0.0
    %v2250 = vmax.f32 %v2245, 0.0
    %v2251 = vpack.c.bf16 %v2249, %v2249
    %v2252 = vpack.c.bf16 %v2250, %v2250
    %v2253 = vld [vmem:[%s5] sm:$0xf]
    %v2254 = vld [vmem:[%s5 + $0x4] sm:$0xf]
    %v2255 = vld [vmem:[%s5 + $0x8] sm:$0xf]
    %v2256 = vld [vmem:[%s5 + $0xc] sm:$0xf]
    %v2257 = vld [vmem:[%s5 + $0x10] sm:$0xf]
    %v2258 = vld [vmem:[%s5 + $0x14] sm:$0xf]
    %v2259 = vld [vmem:[%s5 + $0x18] sm:$0xf]
    %v2260 = vld [vmem:[%s5 + $0x1c] sm:$0xf]
    %v2261 = vld [vmem:[%s5 + $0x20] sm:$0xf]
    %v2262 = vld [vmem:[%s5 + $0x24] sm:$0xf]
    %v2263 = vld [vmem:[%s5 + $0x28] sm:$0xf]
    %v2264 = vld [vmem:[%s5 + $0x2c] sm:$0xf]
    %v2265 = vld [vmem:[%s5 + $0x30] sm:$0xf]
    %v2266 = vld [vmem:[%s5 + $0x34] sm:$0xf]
    %v2267 = vld [vmem:[%s5 + $0x38] sm:$0xf]
    %v2268 = vld [vmem:[%s5 + $0x3c] sm:$0xf]
    %v2269 = vld [vmem:[%s5 + $0x40] sm:$0xf]
    %v2270 = vld [vmem:[%s5 + $0x44] sm:$0xf]
    %v2271 = vld [vmem:[%s5 + $0x48] sm:$0xf]
    %v2272 = vld [vmem:[%s5 + $0x4c] sm:$0xf]
    %v2273 = vld [vmem:[%s5 + $0x50] sm:$0xf]
    %v2274 = vld [vmem:[%s5 + $0x54] sm:$0xf]
    %v2275 = vld [vmem:[%s5 + $0x58] sm:$0xf]
    %v2276 = vld [vmem:[%s5 + $0x5c] sm:$0xf]
    %v2277 = vld [vmem:[%s5 + $0x60] sm:$0xf]
    %v2278 = vld [vmem:[%s5 + $0x64] sm:$0xf]
    %v2279 = vld [vmem:[%s5 + $0x68] sm:$0xf]
    %v2280 = vld [vmem:[%s5 + $0x6c] sm:$0xf]
    %v2281 = vld [vmem:[%s5 + $0x70] sm:$0xf]
    %v2282 = vld [vmem:[%s5 + $0x74] sm:$0xf]
    %v2283 = vld [vmem:[%s5 + $0x78] sm:$0xf]
    %v2284 = vld [vmem:[%s5 + $0x7c] sm:$0xf]
    %v2285 = vld [vmem:[%s6] sm:$0x1]
    %v2287 = vlaneseq
    %v2288 = vshrl.u32 %v2287, 7
    %v2289 = vsub.s32 0, %v2288
    %v2290 = vrot.slane %v2285, %v2289
    %v2324 = vunpack.c.l.b16 %v2253
    %v2325 = vunpack.c.l.b16 %v2254
    %v2326 = vunpack.c.l.b16 %v2255
    %v2327 = vunpack.c.l.b16 %v2256
    %v2328 = vunpack.c.l.b16 %v2257
    %v2329 = vunpack.c.l.b16 %v2258
    %v2330 = vunpack.c.l.b16 %v2259
    %v2331 = vunpack.c.l.b16 %v2260
    %v2332 = vunpack.c.l.b16 %v2261
    %v2333 = vunpack.c.l.b16 %v2262
    %v2334 = vunpack.c.l.b16 %v2263
    %v2335 = vunpack.c.l.b16 %v2264
    %v2336 = vunpack.c.l.b16 %v2265
    %v2337 = vunpack.c.l.b16 %v2266
    %v2338 = vunpack.c.l.b16 %v2267
    %v2339 = vunpack.c.l.b16 %v2268
    %v2340 = vunpack.c.l.b16 %v2269
    %v2341 = vunpack.c.l.b16 %v2270
    %v2342 = vunpack.c.l.b16 %v2271
    %v2343 = vunpack.c.l.b16 %v2272
    %v2344 = vunpack.c.l.b16 %v2273
    %v2345 = vunpack.c.l.b16 %v2274
    %v2346 = vunpack.c.l.b16 %v2275
    %v2347 = vunpack.c.l.b16 %v2276
    %v2348 = vunpack.c.l.b16 %v2277
    %v2349 = vunpack.c.l.b16 %v2278
    %v2350 = vunpack.c.l.b16 %v2279
    %v2351 = vunpack.c.l.b16 %v2280
    %v2352 = vunpack.c.l.b16 %v2281
    %v2353 = vunpack.c.l.b16 %v2282
    %v2354 = vunpack.c.l.b16 %v2283
    %v2355 = vunpack.c.l.b16 %v2284
    %v2356 = vpack.c.b16 %v2325, %v2324
    %v2357 = vpack.c.b16 %v2327, %v2326
    %v2358 = vpack.c.b16 %v2329, %v2328
    %v2359 = vpack.c.b16 %v2331, %v2330
    %v2360 = vpack.c.b16 %v2333, %v2332
    %v2361 = vpack.c.b16 %v2335, %v2334
    %v2362 = vpack.c.b16 %v2337, %v2336
    %v2363 = vpack.c.b16 %v2339, %v2338
    %v2364 = vpack.c.b16 %v2341, %v2340
    %v2365 = vpack.c.b16 %v2343, %v2342
    %v2366 = vpack.c.b16 %v2345, %v2344
    %v2367 = vpack.c.b16 %v2347, %v2346
    %v2368 = vpack.c.b16 %v2349, %v2348
    %v2369 = vpack.c.b16 %v2351, %v2350
    %v2370 = vpack.c.b16 %v2353, %v2352
    %v2371 = vpack.c.b16 %v2355, %v2354
    %2388 = vmatprep.subr.bf16.mxu0 0
    %2389 = vmatpush1.bf16.msra.mxu0 %v2356
    %2390 = vmatprep.subr.bf16.mxu0 0
    %2391 = vmatpush1.bf16.msra.mxu0 %v2357
    %2392 = vmatprep.subr.bf16.mxu0 0
    %2393 = vmatpush1.bf16.msra.mxu0 %v2358
    %2394 = vmatprep.subr.bf16.mxu0 0
    %2395 = vmatpush1.bf16.msra.mxu0 %v2359
    %2396 = vmatprep.subr.bf16.mxu0 0
    %2397 = vmatpush1.bf16.msra.mxu0 %v2360
    %2398 = vmatprep.subr.bf16.mxu0 0
    %2399 = vmatpush1.bf16.msra.mxu0 %v2361
    %2400 = vmatprep.subr.bf16.mxu0 0
    %2401 = vmatpush1.bf16.msra.mxu0 %v2362
    %2402 = vmatprep.subr.bf16.mxu0 0
    %2403 = vmatpush1.bf16.msra.mxu0 %v2363
    %2404 = vmatprep.subr.bf16.mxu0 0
    %2405 = vmatpush1.bf16.msra.mxu0 %v2364
    %2406 = vmatprep.subr.bf16.mxu0 0
    %2407 = vmatpush1.bf16.msra.mxu0 %v2365
    %2408 = vmatprep.subr.bf16.mxu0 0
    %2409 = vmatpush1.bf16.msra.mxu0 %v2366
    %2410 = vmatprep.subr.bf16.mxu0 0
    %2411 = vmatpush1.bf16.msra.mxu0 %v2367
    %2412 = vmatprep.subr.bf16.mxu0 0
    %2413 = vmatpush1.bf16.msra.mxu0 %v2368
    %2414 = vmatprep.subr.bf16.mxu0 0
    %2415 = vmatpush1.bf16.msra.mxu0 %v2369
    %2416 = vmatprep.subr.bf16.mxu0 0
    %2417 = vmatpush1.bf16.msra.mxu0 %v2370
    %2418 = vmatprep.subr.bf16.mxu0 0
    %2419 = vmatpush1.bf16.msra.mxu0 %v2371
    %2420 = vmatprep.mubr.bf16.mxu0 %v2252
    %2421 = vmatmul.mubr.bf16.gmra.mrb[0].mxu0 %v2251
    %v2422 = vpop.f32.mrb[0].mxu0
    %v2423 = vadd.f32 %v2290, %v2422
    %v2424 = vpop.f32.mrb[0].mxu0
    %v2425 = vpop.f32.mrb[0].mxu0
    %v2426 = vpop.f32.mrb[0].mxu0
    %2427 = vdwg.mxu0
    %v2428 = vmax.f32 %v2423, 0.0
    %v2429 = vpack.c.bf16 %v2428, %v2428
    %v2430 = vld [vmem:[%s7] sm:$0xf]
    %v2431 = vld [vmem:[%s7 + $0x4] sm:$0xf]
    %v2432 = vld [vmem:[%s7 + $0x8] sm:$0xf]
    %v2433 = vld [vmem:[%s7 + $0xc] sm:$0xf]
    %v2434 = vld [vmem:[%s7 + $0x10] sm:$0xf]
    %v2435 = vld [vmem:[%s7 + $0x14] sm:$0xf]
    %v2436 = vld [vmem:[%s7 + $0x18] sm:$0xf]
    %v2437 = vld [vmem:[%s7 + $0x1c] sm:$0xf]
    %v2438 = vld [vmem:[%s7 + $0x20] sm:$0xf]
    %v2439 = vld [vmem:[%s7 + $0x24] sm:$0xf]
    %v2440 = vld [vmem:[%s7 + $0x28] sm:$0xf]
    %v2441 = vld [vmem:[%s7 + $0x2c] sm:$0xf]
    %v2442 = vld [vmem:[%s7 + $0x30] sm:$0xf]
    %v2443 = vld [vmem:[%s7 + $0x34] sm:$0xf]
    %v2444 = vld [vmem:[%s7 + $0x38] sm:$0xf]
    %v2445 = vld [vmem:[%s7 + $0x3c] sm:$0xf]
    %v2446 = vld [vmem:[%s8] sm:$0x1]
    %v2448 = vlaneseq
    %v2449 = vshrl.u32 %v2448, 7
    %v2450 = vsub.s32 0, %v2449
    %v2451 = vrot.slane %v2446, %v2450
    %v2469 = vunpack.c.l.b16 %v2430
    %v2470 = vunpack.c.l.b16 %v2431
    %v2471 = vunpack.c.l.b16 %v2432
    %v2472 = vunpack.c.l.b16 %v2433
    %v2473 = vunpack.c.l.b16 %v2434
    %v2474 = vunpack.c.l.b16 %v2435
    %v2475 = vunpack.c.l.b16 %v2436
    %v2476 = vunpack.c.l.b16 %v2437
    %v2477 = vunpack.c.l.b16 %v2438
    %v2478 = vunpack.c.l.b16 %v2439
    %v2479 = vunpack.c.l.b16 %v2440
    %v2480 = vunpack.c.l.b16 %v2441
    %v2481 = vunpack.c.l.b16 %v2442
    %v2482 = vunpack.c.l.b16 %v2443
    %v2483 = vunpack.c.l.b16 %v2444
    %v2484 = vunpack.c.l.b16 %v2445
    %v2485 = vpack.c.b16 %v2470, %v2469
    %v2486 = vpack.c.b16 %v2472, %v2471
    %v2487 = vpack.c.b16 %v2474, %v2473
    %v2488 = vpack.c.b16 %v2476, %v2475
    %v2489 = vpack.c.b16 %v2478, %v2477
    %v2490 = vpack.c.b16 %v2480, %v2479
    %v2491 = vpack.c.b16 %v2482, %v2481
    %v2492 = vpack.c.b16 %v2484, %v2483
    %2501 = vmatprep.subr.bf16.mxu0 0
    %2502 = vmatpush1.bf16.msra.mxu0 %v2485
    %2503 = vmatprep.subr.bf16.mxu0 0
    %2504 = vmatpush1.bf16.msra.mxu0 %v2486
    %2505 = vmatprep.subr.bf16.mxu0 0
    %2506 = vmatpush1.bf16.msra.mxu0 %v2487
    %2507 = vmatprep.subr.bf16.mxu0 0
    %2508 = vmatpush1.bf16.msra.mxu0 %v2488
    %2509 = vmatprep.subr.bf16.mxu0 0
    %2510 = vmatpush1.bf16.msra.mxu0 %v2489
    %2511 = vmatprep.subr.bf16.mxu0 0
    %2512 = vmatpush1.bf16.msra.mxu0 %v2490
    %2513 = vmatprep.subr.bf16.mxu0 0
    %2514 = vmatpush1.bf16.msra.mxu0 %v2491
    %2515 = vmatprep.subr.bf16.mxu0 0
    %2516 = vmatpush1.bf16.msra.mxu0 %v2492
    %2517 = vmatprep.subr.bf16.mxu0 0
    %2518 = vmatpush1.bf16.msra.mxu0 0
    %2519 = vmatprep.subr.bf16.mxu0 0
    %2520 = vmatpush1.bf16.msra.mxu0 0
    %2521 = vmatprep.subr.bf16.mxu0 0
    %2522 = vmatpush1.bf16.msra.mxu0 0
    %2523 = vmatprep.subr.bf16.mxu0 0
    %2524 = vmatpush1.bf16.msra.mxu0 0
    %2525 = vmatprep.subr.bf16.mxu0 0
    %2526 = vmatpush1.bf16.msra.mxu0 0
    %2527 = vmatprep.subr.bf16.mxu0 0
    %2528 = vmatpush1.bf16.msra.mxu0 0
    %2529 = vmatprep.subr.bf16.mxu0 0
    %2530 = vmatpush1.bf16.msra.mxu0 0
    %2531 = vmatprep.subr.bf16.mxu0 0
    %2532 = vmatpush1.bf16.msra.mxu0 0
    %2533 = vmatprep.mubr.bf16.mxu0 0
    %2534 = vmatmul.mubr.bf16.gmra.mrb[0].mxu0 %v2429
    %v2535 = vpop.f32.mrb[0].mxu0
    %v2536 = vadd.f32 %v2451, %v2535
    %v2537 = vpop.f32.mrb[0].mxu0
    %v2538 = vpop.f32.mrb[0].mxu0
    %v2539 = vpop.f32.mrb[0].mxu0
    %2540 = vdwg.mxu0
    %v2541 = vmax.f32 %v2536, 0.0
    %v2542 = vpack.c.bf16 %v2541, %v2541
    %v2543 = vld [vmem:[%s9] sm:$0xf]
    %v2544 = vld [vmem:[%s9 + $0x4] sm:$0xf]
    %v2545 = vld [vmem:[%s9 + $0x8] sm:$0xf]
    %v2546 = vld [vmem:[%s9 + $0xc] sm:$0xf]
    %v2547 = vld [vmem:[%s9 + $0x10] sm:$0xf]
    %v2548 = vld [vmem:[%s9 + $0x14] sm:$0xf]
    %v2549 = vld [vmem:[%s9 + $0x18] sm:$0xf]
    %v2550 = vld [vmem:[%s9 + $0x1c] sm:$0xf]
    %v2551 = vld [vmem:[%s10] sm:$0x1]
    %v2553 = vlaneseq
    %v2554 = vshrl.u32 %v2553, 7
    %v2555 = vsub.s32 0, %v2554
    %v2556 = vrot.slane %v2551, %v2555
    %v2566 = vunpack.c.l.b16 %v2543
    %v2567 = vunpack.c.l.b16 %v2544
    %v2568 = vunpack.c.l.b16 %v2545
    %v2569 = vunpack.c.l.b16 %v2546
    %v2570 = vunpack.c.l.b16 %v2547
    %v2571 = vunpack.c.l.b16 %v2548
    %v2572 = vunpack.c.l.b16 %v2549
    %v2573 = vunpack.c.l.b16 %v2550
    %v2574 = vpack.c.b16 %v2567, %v2566
    %v2575 = vpack.c.b16 %v2569, %v2568
    %v2576 = vpack.c.b16 %v2571, %v2570
    %v2577 = vpack.c.b16 %v2573, %v2572
    %vm2582 = vcmask 523264
    %v2584 = vsel %vm2582, %v2542, 0
    %2586 = vmatprep.subr.bf16.mxu0 0
    %2587 = vmatpush1.bf16.msra.mxu0 %v2574
    %2588 = vmatprep.subr.bf16.mxu0 0
    %2589 = vmatpush1.bf16.msra.mxu0 %v2575
    %2590 = vmatprep.subr.bf16.mxu0 0
    %2591 = vmatpush1.bf16.msra.mxu0 %v2576
    %2592 = vmatprep.subr.bf16.mxu0 0
    %2593 = vmatpush1.bf16.msra.mxu0 %v2577
    %2594 = vmatprep.subr.bf16.mxu0 0
    %2595 = vmatpush1.bf16.msra.mxu0 0
    %2596 = vmatprep.subr.bf16.mxu0 0
    %2597 = vmatpush1.bf16.msra.mxu0 0
    %2598 = vmatprep.subr.bf16.mxu0 0
    %2599 = vmatpush1.bf16.msra.mxu0 0
    %2600 = vmatprep.subr.bf16.mxu0 0
    %2601 = vmatpush1.bf16.msra.mxu0 0
    %2602 = vmatprep.subr.bf16.mxu0 0
    %2603 = vmatpush1.bf16.msra.mxu0 0
    %2604 = vmatprep.subr.bf16.mxu0 0
    %2605 = vmatpush1.bf16.msra.mxu0 0
    %2606 = vmatprep.subr.bf16.mxu0 0
    %2607 = vmatpush1.bf16.msra.mxu0 0
    %2608 = vmatprep.subr.bf16.mxu0 0
    %2609 = vmatpush1.bf16.msra.mxu0 0
    %2610 = vmatprep.subr.bf16.mxu0 0
    %2611 = vmatpush1.bf16.msra.mxu0 0
    %2612 = vmatprep.subr.bf16.mxu0 0
    %2613 = vmatpush1.bf16.msra.mxu0 0
    %2614 = vmatprep.subr.bf16.mxu0 0
    %2615 = vmatpush1.bf16.msra.mxu0 0
    %2616 = vmatprep.subr.bf16.mxu0 0
    %2617 = vmatpush1.bf16.msra.mxu0 0
    %2618 = vmatprep.mubr.bf16.mxu0 0
    %2619 = vmatmul.mubr.bf16.gmra.mrb[0].mxu0 %v2584
    %v2620 = vpop.f32.mrb[0].mxu0
    %v2621 = vadd.f32 %v2556, %v2620
    %v2622 = vpop.f32.mrb[0].mxu0
    %v2623 = vpop.f32.mrb[0].mxu0
    %v2624 = vpop.f32.mrb[0].mxu0
    %2625 = vdwg.mxu0
    %2626 = vst [vmem:[#allocation2] sm:$0xff] %v2621
    // Predicated region
    $region46: #{classifier_net_forward.1} parent=1 // pred_check
      _
    $region47: #{classifier_net_forward.1} parent=1 // pred_check_branch
      %2628 = sbr.rel (0) target = $region49
    $region48: #{classifier_net_forward.1} parent=1 // pred_region
      %s2630 = ssub.s32 128, 128
      %2631 = vsyncadd [#allocation3], %s2630
      %s2633 = sshll.u32 [#allocation2], 4
      %s2634 = int_to_ptr.vmem [resolvable:$true] %s2633
      %2636 = dma.vmem_to_hbm [thread:$0]  %s2634, 128, %s11, [#allocation3]
    $region49: #{classifier_net_forward.1} parent=1 // pred_fallthru
      _
    // Predicated region
    $region50: #{classifier_net_forward.1} parent=1 // pred_check
      _
    $region51: #{classifier_net_forward.1} parent=1 // pred_check_branch
      %2638 = sbr.rel (0) target = $region53
    $region52: #{classifier_net_forward.1} parent=1 // pred_region
      %2639 = dma.done [#allocation3], 128
    $region53: #{classifier_net_forward.1} parent=1 // pred_fallthru
      _
    %2640 = vsyncpa [#allocation3], 1

</llo_original>
